<compile_context>
chip_gen: v7x
topology: tpu7x:2x2x1
jax: 0.10.0
libtpu: 0.0.40
codegen_flags: <defaults>
</compile_context>

<pallas_src>
import functools

import jax
import jax.numpy as jnp
from jax import lax
from jax.experimental import pallas as pl
from jax.experimental.pallas import tpu as pltpu

_MIB = 1024 * 1024


def _sdpa_kernel(*refs, has_mask, return_attn, inv_temperature, exp_in_bf16):
    idx = 0
    if has_mask:
        mask_ref = refs[idx]
        idx += 1
    q_ref, k_ref, v_ref = refs[idx:idx + 3]
    idx += 3
    out_ref = refs[idx]
    idx += 1
    attn_ref = refs[idx] if return_attn else None

    q = q_ref[...]            # (TQ, D)
    k = k_ref[...]            # (Lk, D)
    v = v_ref[...]            # (Lk, Dv)

    # Scale q once, in its native dtype (O(TQ*D)) instead of scaling scores.
    q_scaled = q * jnp.asarray(inv_temperature, dtype=q.dtype)

    # scores = q @ k^T on the MXU, expressed as an NT dot_general so k is
    # consumed in its native (Lk, D) layout (no transpose before the MXU push).
    s = lax.dot_general(
        q_scaled, k,
        dimension_numbers=(((1,), (1,)), ((), ())),
        preferred_element_type=jnp.float32)            # (TQ, Lk) f32

    if has_mask:
        # masked_fill(attn_mask, -1e6)
        s = jnp.where(mask_ref[...] != 0, jnp.float32(-1000000.0), s)

    # Numerically stable softmax over the last axis.
    s_max = jnp.max(s, axis=-1, keepdims=True)
    x = s - s_max
    if exp_in_bf16:
        # bf16 EUP exp (v6e/v7x only); denominator accumulated in f32.
        e = jnp.exp(x.astype(jnp.bfloat16)).astype(jnp.float32)
    else:
        e = jnp.exp(x)
    denom = jnp.sum(e, axis=-1, keepdims=True)
    p = e * pl.reciprocal(denom, approx=True)          # EUP reciprocal

    if return_attn:
        attn_ref[...] = p.astype(attn_ref.dtype)

    # output = attn @ v on the MXU (p cast to v's dtype; f32 accumulation).
    out_ref[...] = jnp.dot(p.astype(v.dtype), v,
                           preferred_element_type=jnp.float32).astype(out_ref.dtype)


def _round_up(x, m):
    return ((x + m - 1) // m) * m


def _vmem_capacity_bytes():
    try:
        return int(pltpu.get_tpu_info().vmem_capacity_bytes)
    except Exception:
        return 64 * _MIB        # conservative: v7x per-TensorCore VMEM


def _bf16_eup_available():
    # v6e / v7x have a bf16 EUP; v2-v5 do not.
    try:
        kind = jax.devices()[0].device_kind.lower()
    except Exception:
        return False
    return not any(tag in kind for tag in ("v2", "v3", "v4", "v5"))


def _per_step_vmem(tq, lk, d, dv, itemsize, attn_itemsize, has_mask, return_attn):
    need = 2 * tq * d * itemsize          # q block (double-buffered)
    need += lk * d * itemsize             # k block (single-buffered, iq-invariant)
    need += lk * dv * itemsize            # v block (single-buffered, iq-invariant)
    need += 2 * tq * dv * itemsize        # out block (double-buffered)
    if has_mask:
        need += 2 * tq * lk               # int8 mask block (double-buffered)
    if return_attn:
        need += 2 * tq * lk * attn_itemsize
    need += 3 * tq * lk * 4               # f32 live temporaries: s, e, p
    return need


def scaled_dot_product_attention(q, k, v, attn_mask=None, *, temperature=1.0,
                                 block_q=None, return_attn=True, attn_dtype=None):
    """Pallas implementation of ScaledDotProductAttention.forward (softmax path)."""
    B, Lq, D = q.shape
    Bk, Lk, Dk = k.shape
    Bv, Lkv, Dv = v.shape
    assert B == Bk == Bv and D == Dk and Lk == Lkv

    has_mask = attn_mask is not None
    if attn_dtype is None:
        attn_dtype = q.dtype                 # matches the torch module's dtype
    itemsize = q.dtype.itemsize
    attn_itemsize = jnp.dtype(attn_dtype).itemsize

    # ---- chip-aware VMEM budget ---------------------------------------------
    vmem_cap = _vmem_capacity_bytes()
    budget = max(16 * _MIB, vmem_cap - 16 * _MIB)   # headroom for compiler scratch

    # ---- Lq tile size (multiple of 8 sublanes, VMEM-aware) --------------------
    if block_q is not None:
        tq = int(block_q)
    elif Lq <= 8:
        tq = Lq
    else:
        max_tq = min(512, _round_up(Lq, 8))
        tq = 8
        for cand in (512, 384, 256, 128, 64, 32, 16, 8):
            if cand > max_tq:
                continue
            if _per_step_vmem(cand, Lk, D, Dv, itemsize, attn_itemsize,
                              has_mask, return_attn) <= budget:
                tq = cand
                break
        # Megacore (v7x has 2 TCs): keep >= 2 grid programs when B == 1.
        if B == 1 and -(-Lq // tq) < 2:
            tq = min(tq, max(8, _round_up(-(-Lq // 2), 8)))

    pad = (-Lq) % tq
    q_in = q
    mask_in = attn_mask.astype(jnp.int8) if has_mask else None
    if pad:
        q_in = jnp.pad(q, ((0, 0), (0, pad), (0, 0)))
        if has_mask:
            mask_in = jnp.pad(mask_in, ((0, 0), (0, pad), (0, 0)))
    lq_p = Lq + pad
    num_q_blocks = lq_p // tq

    need = _per_step_vmem(tq, Lk, D, Dv, itemsize, attn_itemsize,
                          has_mask, return_attn)
    vmem_limit = int(min(vmem_cap - 4 * _MIB, max(32 * _MIB, need + 8 * _MIB)))
    vmem_limit = max(vmem_limit, 16 * _MIB)

    cost = pl.CostEstimate(
        flops=2 * B * lq_p * Lk * (D + Dv),
        transcendentals=B * lq_p * Lk,
        bytes_accessed=(B * lq_p * D * itemsize        # q
                        + B * Lk * D * itemsize        # k
                        + B * Lk * Dv * itemsize       # v
                        + B * lq_p * Dv * itemsize     # out
                        + (B * lq_p * Lk if has_mask else 0)                    # mask
                        + (B * lq_p * Lk * attn_itemsize if return_attn else 0)))

    exp_in_bf16 = bool(q.dtype == jnp.bfloat16 and _bf16_eup_available())

    kernel = functools.partial(
        _sdpa_kernel, has_mask=has_mask, return_attn=return_attn,
        inv_temperature=1.0 / float(temperature), exp_in_bf16=exp_in_bf16)

    out_shapes = [jax.ShapeDtypeStruct((B, lq_p, Dv), q.dtype)]
    out_specs = [pl.BlockSpec((None, tq, Dv), lambda b, iq: (b, iq, 0))]
    if return_attn:
        out_shapes.append(jax.ShapeDtypeStruct((B, lq_p, Lk), attn_dtype))
        out_specs.append(pl.BlockSpec((None, tq, Lk), lambda b, iq: (b, iq, 0)))

    inputs = ([mask_in] if has_mask else []) + [q_in, k, v]

    def build_call(single_buffer_kv):
        def kv_spec(block_shape, index_map):
            if single_buffer_kv:
                # K/V block index is invariant along iq: one buffer is enough.
                return pl.BlockSpec(block_shape, index_map,
                                    pipeline_mode=pl.Buffered(1))
            return pl.BlockSpec(block_shape, index_map)

        in_specs = []
        if has_mask:
            in_specs.append(pl.BlockSpec((None, tq, Lk), lambda b, iq: (b, iq, 0)))
        in_specs += [
            pl.BlockSpec((None, tq, D), lambda b, iq: (b, iq, 0)),      # q
            kv_spec((None, Lk, D), lambda b, iq: (b, 0, 0)),            # k
            kv_spec((None, Lk, Dv), lambda b, iq: (b, 0, 0)),           # v
        ]
        return pl.pallas_call(
            kernel,
            out_shape=tuple(out_shapes),
            grid=(B, num_q_blocks),
            in_specs=in_specs,
            out_specs=tuple(out_specs),
            compiler_params=pltpu.CompilerParams(
                dimension_semantics=("parallel", "parallel"),
                vmem_limit_bytes=vmem_limit),
            cost_estimate=cost,
        )

    try:
        res = build_call(True)(*inputs)
    except Exception:
        # pl.Buffered(1) (single-buffered K/V) not supported by this jax/libtpu:
        # fall back to default double buffering. Genuine errors re-raise here.
        res = build_call(False)(*inputs)

    if return_attn:
        out, attn = res
        if pad:
            out = out[:, :Lq, :]
            attn = attn[:, :Lq, :]
        return out, attn
    (out,) = res
    if pad:
        out = out[:, :Lq, :]
    return out


def _reference(q, k, v, attn_mask, temperature):
    s = jnp.einsum("bqd,bkd->bqk", q, k) / temperature
    if attn_mask is not None:
        s = jnp.where(attn_mask, -1000000.0, s)
    p = jax.nn.softmax(s, axis=-1)
    return jnp.einsum("bqk,bkd->bqd", p, v), p


if __name__ == "__main__":
    B, Lq, Lk, D, Dv = 2, 8, 8, 32, 32
    temperature = float(D) ** 0.5

    key = jax.random.PRNGKey(0)
    kq, kk, kv = jax.random.split(key, 3)
    q = jax.random.normal(kq, (B, Lq, D), dtype=jnp.float32)
    k = jax.random.normal(kk, (B, Lk, D), dtype=jnp.float32)
    v = jax.random.normal(kv, (B, Lk, Dv), dtype=jnp.float32)

    # Example boolean mask (strict upper triangle, causal-style).
    attn_mask = jnp.triu(jnp.ones((Lq, Lk), dtype=bool), k=1)[None].repeat(B, axis=0)

    # Masked path, returning (output, attn) like the PyTorch module.
    out, attn = scaled_dot_product_attention(q, k, v, attn_mask,
                                             temperature=temperature)
    jax.block_until_ready((out, attn))
    ref_out, ref_attn = _reference(q, k, v, attn_mask, temperature)
    # Tolerance accounts for the EUP approximate reciprocal in the softmax denom.
    assert jnp.allclose(out, ref_out, atol=2e-3, rtol=2e-3)
    assert jnp.allclose(attn, ref_attn, atol=2e-3, rtol=2e-3)

    # Mask-free specialization (no synthesized mask, no masked select).
    out_nm, attn_nm = scaled_dot_product_attention(q, k, v, None,
                                                   temperature=temperature)
    jax.block_until_ready((out_nm, attn_nm))
    ref_out_nm, ref_attn_nm = _reference(q, k, v, None, temperature)
    assert jnp.allclose(out_nm, ref_out_nm, atol=2e-3, rtol=2e-3)
    assert jnp.allclose(attn_nm, ref_attn_nm, atol=2e-3, rtol=2e-3)

    # Output-only specialization (drops the dominant attn HBM writeback).
    out_only = scaled_dot_product_attention(q, k, v, attn_mask,
                                            temperature=temperature,
                                            return_attn=False)
    out_only = jax.block_until_ready(out_only)
    assert jnp.allclose(out_only, ref_out, atol=2e-3, rtol=2e-3)

    print("KERNEL_OK")
</pallas_src>

<mosaic_0001>
module attributes {stable_mosaic.version = 11 : i64} {
  func.func @_sdpa_kernel(%arg0: i32, %arg1: i32, %arg2: memref<1x8x8xi8, #tpu.memory_space<vmem>>, %arg3: memref<1x8x32xf32, #tpu.memory_space<vmem>>, %arg4: memref<1x8x32xf32, #tpu.memory_space<vmem>>, %arg5: memref<1x8x32xf32, #tpu.memory_space<vmem>>, %arg6: memref<1x8x32xf32, #tpu.memory_space<vmem>>, %arg7: memref<1x8x8xf32, #tpu.memory_space<vmem>>) attributes {dimension_semantics = [#tpu.dimension_semantics<parallel>, #tpu.dimension_semantics<parallel>], iteration_bounds = array<i64: 2, 1>, scalar_prefetch = 0 : i64, scratch_operands = 0 : i64, tpu.core_type = #tpu.core_type<tc>, window_params = [{transform_indices = @transform_0, window_bounds = array<i64: 1, 8, 8>}, {transform_indices = @transform_1, window_bounds = array<i64: 1, 8, 32>}, {pipeline_mode = #tpu.pipeline_mode<synchronous>, transform_indices = @transform_2, window_bounds = array<i64: 1, 8, 32>}, {pipeline_mode = #tpu.pipeline_mode<synchronous>, transform_indices = @transform_3, window_bounds = array<i64: 1, 8, 32>}, {transform_indices = @transform_4, window_bounds = array<i64: 1, 8, 32>}, {transform_indices = @transform_5, window_bounds = array<i64: 1, 8, 8>}]} {
    %c0 = arith.constant 0 : index
    %c0_0 = arith.constant 0 : index
    %c0_1 = arith.constant 0 : index
    %0 = vector.load %arg3[%c0, %c0_0, %c0_1] : memref<1x8x32xf32, #tpu.memory_space<vmem>>, vector<1x8x32xf32>
    %1 = vector.shape_cast %0 : vector<1x8x32xf32> to vector<8x32xf32>
    %c0_2 = arith.constant 0 : index
    %c0_3 = arith.constant 0 : index
    %c0_4 = arith.constant 0 : index
    %2 = vector.load %arg4[%c0_2, %c0_3, %c0_4] : memref<1x8x32xf32, #tpu.memory_space<vmem>>, vector<1x8x32xf32>
    %3 = vector.shape_cast %2 : vector<1x8x32xf32> to vector<8x32xf32>
    %c0_5 = arith.constant 0 : index
    %c0_6 = arith.constant 0 : index
    %c0_7 = arith.constant 0 : index
    %4 = vector.load %arg5[%c0_5, %c0_6, %c0_7] : memref<1x8x32xf32, #tpu.memory_space<vmem>>, vector<1x8x32xf32>
    %5 = vector.shape_cast %4 : vector<1x8x32xf32> to vector<8x32xf32>
    %cst = arith.constant 0.176776692 : f32
    %6 = vector.broadcast %cst : f32 to vector<8x32xf32>
    %7 = arith.mulf %1, %6 : vector<8x32xf32>
    %cst_8 = arith.constant dense<0.000000e+00> : vector<8x8xf32>
    %8 = tpu.matmul %7, %3, %cst_8 {dimension_numbers = #tpu.dot_dimension_numbers<[1], [1], [0], [0], [0, 0, 1, 0], [], []>} : vector<8x32xf32>, vector<8x32xf32>, vector<8x8xf32> -> vector<8x8xf32>
    %c0_9 = arith.constant 0 : index
    %c0_10 = arith.constant 0 : index
    %c0_11 = arith.constant 0 : index
    %9 = vector.load %arg2[%c0_9, %c0_10, %c0_11] : memref<1x8x8xi8, #tpu.memory_space<vmem>>, vector<1x8x8xi8>
    %10 = vector.shape_cast %9 : vector<1x8x8xi8> to vector<8x8xi8>
    %c0_i8 = arith.constant 0 : i8
    %11 = vector.broadcast %c0_i8 : i8 to vector<8x8xi8>
    %12 = arith.cmpi ne, %10, %11 : vector<8x8xi8>
    %cst_12 = arith.constant -1.000000e+06 : f32
    %13 = vector.broadcast %cst_12 : f32 to vector<8x8xf32>
    %14 = arith.select %12, %13, %8 : vector<8x8xi1>, vector<8x8xf32>
    %cst_13 = arith.constant dense<0xFF800000> : vector<8xf32>
    %15 = vector.multi_reduction <maximumf>, %14, %cst_13 [1] : vector<8x8xf32> to vector<8xf32>
    %16 = vector.shape_cast %15 : vector<8xf32> to vector<8x1xf32>
    %17 = vector.broadcast %16 : vector<8x1xf32> to vector<8x8xf32>
    %18 = arith.subf %14, %17 : vector<8x8xf32>
    %19 = math.exp %18 : vector<8x8xf32>
    %cst_14 = arith.constant dense<0.000000e+00> : vector<8xf32>
    %20 = vector.multi_reduction <add>, %19, %cst_14 [1] : vector<8x8xf32> to vector<8xf32>
    %21 = vector.shape_cast %20 : vector<8xf32> to vector<8x1xf32>
    %22 = tpu.reciprocal %21 {approx = true} : vector<8x1xf32> -> vector<8x1xf32>
    %23 = vector.broadcast %22 : vector<8x1xf32> to vector<8x8xf32>
    %24 = arith.mulf %19, %23 : vector<8x8xf32>
    %c0_15 = arith.constant 0 : index
    %c0_16 = arith.constant 0 : index
    %c0_17 = arith.constant 0 : index
    %25 = vector.load %arg7[%c0_15, %c0_16, %c0_17] : memref<1x8x8xf32, #tpu.memory_space<vmem>>, vector<1x8x8xf32>
    %26 = vector.shape_cast %25 : vector<1x8x8xf32> to vector<8x8xf32>
    %27 = vector.shape_cast %24 : vector<8x8xf32> to vector<1x8x8xf32>
    tpu.vector_store %arg7[%c0_15, %c0_16, %c0_17], %27 {strides = array<i32>} : memref<1x8x8xf32, #tpu.memory_space<vmem>>, vector<1x8x8xf32>,
    %cst_18 = arith.constant dense<0.000000e+00> : vector<8x32xf32>
    %28 = tpu.matmul %24, %5, %cst_18 {dimension_numbers = #tpu.dot_dimension_numbers<[1], [0], [0], [1], [0, 0, 1, 1], [], []>} : vector<8x8xf32>, vector<8x32xf32>, vector<8x32xf32> -> vector<8x32xf32>
    %c0_19 = arith.constant 0 : index
    %c0_20 = arith.constant 0 : index
    %c0_21 = arith.constant 0 : index
    %29 = vector.load %arg6[%c0_19, %c0_20, %c0_21] : memref<1x8x32xf32, #tpu.memory_space<vmem>>, vector<1x8x32xf32>
    %30 = vector.shape_cast %29 : vector<1x8x32xf32> to vector<8x32xf32>
    %31 = vector.shape_cast %28 : vector<8x32xf32> to vector<1x8x32xf32>
    tpu.vector_store %arg6[%c0_19, %c0_20, %c0_21], %31 {strides = array<i32>} : memref<1x8x32xf32, #tpu.memory_space<vmem>>, vector<1x8x32xf32>,
    return
  }
  func.func @transform_0(%arg0: i32, %arg1: i32) -> (i32, i32, i32) {
    %c0_i32 = arith.constant 0 : i32
    %c0_i32_0 = arith.constant 0 : i32
    return %arg0, %arg1, %c0_i32 : i32, i32, i32
  }
  func.func @transform_1(%arg0: i32, %arg1: i32) -> (i32, i32, i32) {
    %c0_i32 = arith.constant 0 : i32
    %c0_i32_0 = arith.constant 0 : i32
    return %arg0, %arg1, %c0_i32 : i32, i32, i32
  }
  func.func @transform_2(%arg0: i32, %arg1: i32) -> (i32, i32, i32) {
    %c0_i32 = arith.constant 0 : i32
    %c0_i32_0 = arith.constant 0 : i32
    %c0_i32_1 = arith.constant 0 : i32
    return %arg0, %c0_i32, %c0_i32_0 : i32, i32, i32
  }
  func.func @transform_3(%arg0: i32, %arg1: i32) -> (i32, i32, i32) {
    %c0_i32 = arith.constant 0 : i32
    %c0_i32_0 = arith.constant 0 : i32
    %c0_i32_1 = arith.constant 0 : i32
    return %arg0, %c0_i32, %c0_i32_0 : i32, i32, i32
  }
  func.func @transform_4(%arg0: i32, %arg1: i32) -> (i32, i32, i32) {
    %c0_i32 = arith.constant 0 : i32
    %c0_i32_0 = arith.constant 0 : i32
    return %arg0, %arg1, %c0_i32 : i32, i32, i32
  }
  func.func @transform_5(%arg0: i32, %arg1: i32) -> (i32, i32, i32) {
    %c0_i32 = arith.constant 0 : i32
    %c0_i32_0 = arith.constant 0 : i32
    return %arg0, %arg1, %c0_i32 : i32, i32, i32
  }
}

module attributes {stable_mosaic.version = 11 : i64} {
  func.func @_sdpa_kernel(%arg0: i32, %arg1: i32, %arg2: memref<1x8x8xi8, #tpu.memory_space<vmem>>, %arg3: memref<1x8x32xf32, #tpu.memory_space<vmem>>, %arg4: memref<1x8x32xf32, #tpu.memory_space<vmem>>, %arg5: memref<1x8x32xf32, #tpu.memory_space<vmem>>, %arg6: memref<1x8x32xf32, #tpu.memory_space<vmem>>, %arg7: memref<1x8x8xf32, #tpu.memory_space<vmem>>) attributes {dimension_semantics = [#tpu.dimension_semantics<parallel>, #tpu.dimension_semantics<parallel>], iteration_bounds = array<i64: 2, 1>, scalar_prefetch = 0 : i64, scratch_operands = 0 : i64, tpu.core_type = #tpu.core_type<tc>, window_params = [{transform_indices = @transform_0, window_bounds = array<i64: 1, 8, 8>}, {transform_indices = @transform_1, window_bounds = array<i64: 1, 8, 32>}, {transform_indices = @transform_2, window_bounds = array<i64: 1, 8, 32>}, {transform_indices = @transform_3, window_bounds = array<i64: 1, 8, 32>}, {transform_indices = @transform_4, window_bounds = array<i64: 1, 8, 32>}, {transform_indices = @transform_5, window_bounds = array<i64: 1, 8, 8>}]} {
    %c0 = arith.constant 0 : index
    %c0_0 = arith.constant 0 : index
    %c0_1 = arith.constant 0 : index
    %0 = vector.load %arg3[%c0, %c0_0, %c0_1] : memref<1x8x32xf32, #tpu.memory_space<vmem>>, vector<1x8x32xf32>
    %1 = vector.shape_cast %0 : vector<1x8x32xf32> to vector<8x32xf32>
    %c0_2 = arith.constant 0 : index
    %c0_3 = arith.constant 0 : index
    %c0_4 = arith.constant 0 : index
    %2 = vector.load %arg4[%c0_2, %c0_3, %c0_4] : memref<1x8x32xf32, #tpu.memory_space<vmem>>, vector<1x8x32xf32>
    %3 = vector.shape_cast %2 : vector<1x8x32xf32> to vector<8x32xf32>
    %c0_5 = arith.constant 0 : index
    %c0_6 = arith.constant 0 : index
    %c0_7 = arith.constant 0 : index
    %4 = vector.load %arg5[%c0_5, %c0_6, %c0_7] : memref<1x8x32xf32, #tpu.memory_space<vmem>>, vector<1x8x32xf32>
    %5 = vector.shape_cast %4 : vector<1x8x32xf32> to vector<8x32xf32>
    %cst = arith.constant 0.176776692 : f32
    %6 = vector.broadcast %cst : f32 to vector<8x32xf32>
    %7 = arith.mulf %1, %6 : vector<8x32xf32>
    %cst_8 = arith.constant dense<0.000000e+00> : vector<8x8xf32>
    %8 = tpu.matmul %7, %3, %cst_8 {dimension_numbers = #tpu.dot_dimension_numbers<[1], [1], [0], [0], [0, 0, 1, 0], [], []>} : vector<8x32xf32>, vector<8x32xf32>, vector<8x8xf32> -> vector<8x8xf32>
    %c0_9 = arith.constant 0 : index
    %c0_10 = arith.constant 0 : index
    %c0_11 = arith.constant 0 : index
    %9 = vector.load %arg2[%c0_9, %c0_10, %c0_11] : memref<1x8x8xi8, #tpu.memory_space<vmem>>, vector<1x8x8xi8>
    %10 = vector.shape_cast %9 : vector<1x8x8xi8> to vector<8x8xi8>
    %c0_i8 = arith.constant 0 : i8
    %11 = vector.broadcast %c0_i8 : i8 to vector<8x8xi8>
    %12 = arith.cmpi ne, %10, %11 : vector<8x8xi8>
    %cst_12 = arith.constant -1.000000e+06 : f32
    %13 = vector.broadcast %cst_12 : f32 to vector<8x8xf32>
    %14 = arith.select %12, %13, %8 : vector<8x8xi1>, vector<8x8xf32>
    %cst_13 = arith.constant dense<0xFF800000> : vector<8xf32>
    %15 = vector.multi_reduction <maximumf>, %14, %cst_13 [1] : vector<8x8xf32> to vector<8xf32>
    %16 = vector.shape_cast %15 : vector<8xf32> to vector<8x1xf32>
    %17 = vector.broadcast %16 : vector<8x1xf32> to vector<8x8xf32>
    %18 = arith.subf %14, %17 : vector<8x8xf32>
    %19 = math.exp %18 : vector<8x8xf32>
    %cst_14 = arith.constant dense<0.000000e+00> : vector<8xf32>
    %20 = vector.multi_reduction <add>, %19, %cst_14 [1] : vector<8x8xf32> to vector<8xf32>
    %21 = vector.shape_cast %20 : vector<8xf32> to vector<8x1xf32>
    %22 = tpu.reciprocal %21 {approx = true} : vector<8x1xf32> -> vector<8x1xf32>
    %23 = vector.broadcast %22 : vector<8x1xf32> to vector<8x8xf32>
    %24 = arith.mulf %19, %23 : vector<8x8xf32>
    %c0_15 = arith.constant 0 : index
    %c0_16 = arith.constant 0 : index
    %c0_17 = arith.constant 0 : index
    %25 = vector.load %arg7[%c0_15, %c0_16, %c0_17] : memref<1x8x8xf32, #tpu.memory_space<vmem>>, vector<1x8x8xf32>
    %26 = vector.shape_cast %25 : vector<1x8x8xf32> to vector<8x8xf32>
    %27 = vector.shape_cast %24 : vector<8x8xf32> to vector<1x8x8xf32>
    tpu.vector_store %arg7[%c0_15, %c0_16, %c0_17], %27 {strides = array<i32>} : memref<1x8x8xf32, #tpu.memory_space<vmem>>, vector<1x8x8xf32>,
    %cst_18 = arith.constant dense<0.000000e+00> : vector<8x32xf32>
    %28 = tpu.matmul %24, %5, %cst_18 {dimension_numbers = #tpu.dot_dimension_numbers<[1], [0], [0], [1], [0, 0, 1, 1], [], []>} : vector<8x8xf32>, vector<8x32xf32>, vector<8x32xf32> -> vector<8x32xf32>
    %c0_19 = arith.constant 0 : index
    %c0_20 = arith.constant 0 : index
    %c0_21 = arith.constant 0 : index
    %29 = vector.load %arg6[%c0_19, %c0_20, %c0_21] : memref<1x8x32xf32, #tpu.memory_space<vmem>>, vector<1x8x32xf32>
    %30 = vector.shape_cast %29 : vector<1x8x32xf32> to vector<8x32xf32>
    %31 = vector.shape_cast %28 : vector<8x32xf32> to vector<1x8x32xf32>
    tpu.vector_store %arg6[%c0_19, %c0_20, %c0_21], %31 {strides = array<i32>} : memref<1x8x32xf32, #tpu.memory_space<vmem>>, vector<1x8x32xf32>,
    return
  }
  func.func @transform_0(%arg0: i32, %arg1: i32) -> (i32, i32, i32) {
    %c0_i32 = arith.constant 0 : i32
    %c0_i32_0 = arith.constant 0 : i32
    return %arg0, %arg1, %c0_i32 : i32, i32, i32
  }
  func.func @transform_1(%arg0: i32, %arg1: i32) -> (i32, i32, i32) {
    %c0_i32 = arith.constant 0 : i32
    %c0_i32_0 = arith.constant 0 : i32
    return %arg0, %arg1, %c0_i32 : i32, i32, i32
  }
  func.func @transform_2(%arg0: i32, %arg1: i32) -> (i32, i32, i32) {
    %c0_i32 = arith.constant 0 : i32
    %c0_i32_0 = arith.constant 0 : i32
    %c0_i32_1 = arith.constant 0 : i32
    return %arg0, %c0_i32, %c0_i32_0 : i32, i32, i32
  }
  func.func @transform_3(%arg0: i32, %arg1: i32) -> (i32, i32, i32) {
    %c0_i32 = arith.constant 0 : i32
    %c0_i32_0 = arith.constant 0 : i32
    %c0_i32_1 = arith.constant 0 : i32
    return %arg0, %c0_i32, %c0_i32_0 : i32, i32, i32
  }
  func.func @transform_4(%arg0: i32, %arg1: i32) -> (i32, i32, i32) {
    %c0_i32 = arith.constant 0 : i32
    %c0_i32_0 = arith.constant 0 : i32
    return %arg0, %arg1, %c0_i32 : i32, i32, i32
  }
  func.func @transform_5(%arg0: i32, %arg1: i32) -> (i32, i32, i32) {
    %c0_i32 = arith.constant 0 : i32
    %c0_i32_0 = arith.constant 0 : i32
    return %arg0, %arg1, %c0_i32 : i32, i32, i32
  }
}

</mosaic_0001>

<llo_original>
// kernel: tpu_custom_call.1
$region0: #{tpu_custom_call.1}
  #allocation0 [shape = 'u32[]', space=smem, size = 0x4, offset = 0x4, fixed_abs, tag = 'smem constant byte address 0x4 - core index']
  #allocation1 [shape = 'u32[144,128]{1,0:T(1,128)}', space=vmem, size = 0x12000, scoped, tag = 'internal scratch']
  %s0 = inlined_call_operand.hbm [shape: s8[2,8,8], index: 0, kind: input, shape index: {}]
  %s1 = inlined_call_operand.hbm [shape: f32[2,8,32], index: 1, kind: input, shape index: {}]
  %s2 = inlined_call_operand.hbm [shape: f32[2,8,32], index: 2, kind: input, shape index: {}]
  %s3 = inlined_call_operand.hbm [shape: f32[2,8,32], index: 3, kind: input, shape index: {}]
  %s4 = inlined_call_operand.hbm [shape: f32[2,8,32], index: 4, kind: output, shape index: {0}]
  %s5 = inlined_call_operand.hbm [shape: f32[2,8,8], index: 5, kind: output, shape index: {1}]
  %6 = xla_tuple %s4, %s5
  %s7 = sld [smem:[#allocation0]]
  $region73: #{tpu_custom_call.1} parent=0
    _
  %s9 = ssub.s32 1, %s7
  %s10 = scalar_select 0, %s9, %s7
  $region1: #{tpu_custom_call.1} parent=0
    #allocation2 [shape = 'u8[2048]{0}', space=vmem, size = 0x800, scoped, tag = 'input window, operand 0']
    #allocation3 [shape = 's32[2]{0}', space=sflag, size = 0x8, scoped, tag = 'scoped memory for tpu_custom_call.1']
    #allocation4 [shape = 's32[2]{0}', space=sflag, size = 0x8, scoped, tag = 'scoped memory for tpu_custom_call.1']
    #allocation5 [shape = 'u8[8192]{0}', space=vmem, size = 0x2000, scoped, tag = 'input window, operand 1']
    #allocation6 [shape = 's32[2]{0}', space=sflag, size = 0x8, scoped, tag = 'scoped memory for tpu_custom_call.1']
    #allocation7 [shape = 'u8[4096]{0}', space=vmem, size = 0x1000, scoped, tag = 'input window, operand 2, single buffered']
    #allocation8 [shape = 'u8[4096]{0}', space=vmem, size = 0x1000, scoped, tag = 'input window, operand 3, single buffered']
    #allocation9 [shape = 's32[1]{0}', space=sflag, size = 0x4, scoped, tag = 'scoped memory for tpu_custom_call.1']
    #allocation10 [shape = 'u8[8192]{0}', space=vmem, size = 0x2000, scoped, tag = 'output window, operand 0']
    #allocation11 [shape = 'u8[8192]{0}', space=vmem, size = 0x2000, scoped, tag = 'output window, operand 1']
    #allocation12 [shape = 's32[2]{0}', space=sflag, size = 0x8, scoped, tag = 'scoped memory for tpu_custom_call.1']
    %11 = vsyncpa [#allocation3], 0
    %s12 = scalar_lea.sflag [#allocation3], 1
    %13 = vsyncpa %s12, 0
    %14 = vsyncpa [#allocation6], 0
    %s15 = scalar_lea.sflag [#allocation6], 1
    %16 = vsyncpa %s15, 0
    %17 = vsyncpa [#allocation9], 0
    %18 = vsyncpa [#allocation4], 0
    %s19 = scalar_lea.sflag [#allocation4], 1
    %20 = vsyncpa %s19, 0
    %21 = vsyncpa [#allocation12], 0
    %s22 = scalar_lea.sflag [#allocation12], 1
    %23 = vsyncpa %s22, 0
    loop: start=0, step=1, limit=4
    $region2: #{tpu_custom_call.1} parent=1 // loop_pre_header
      _
    $region3: #{tpu_custom_call.1} parent=1 // loop_header
      %s25 = sphi 0, %s29
      %p26 = scmp.ge.s32.totalorder %s25, 4
      %s32 = sphi 0, %s44
      %s33 = sphi 0, %s40
      %s34 = sphi 0, %s32
      %s35 = sphi 0, %s33
      %s36 = sphi 0, %s34
      %s37 = sphi 0, %s35
      %s49 = sphi 0, %s51
      %s52 = sphi 0, %s49
      %s53 = sphi 0, %s52
      %s69 = sphi 0, %s53
      %s77 = sphi 0, %s79
      %s80 = sphi 0, %s77
      %s81 = sphi 0, %s80
      %s97 = sphi 0, %s81
      %s103 = sphi 0, %s105
      %s106 = sphi 0, %s103
      %s107 = sphi 0, %s106
      %s123 = sphi 0, %s107
      %s129 = sphi 0, %s131
      %s132 = sphi 0, %s129
      %s133 = sphi 0, %s132
      %s149 = sphi 0, %s133
      %s157 = sphi 0, %s159
      %s160 = sphi 0, %s157
      %s161 = sphi 0, %s160
      %s177 = sphi 0, %s161
      %s185 = sphi 0, %s187
      %s188 = sphi 0, %s185
      %s189 = sphi 0, %s188
      %s205 = sphi 0, %s189
    $region4: #{tpu_custom_call.1} parent=1 // loop_header_branch
      %28 = sbr.rel (%p26) target = $region8
    $region5: #{tpu_custom_call.1} parent=1 // loop_body
      %s30 = ssub.s32 %s25, 1
      %s31 = ssub.s32 %s25, 2
      %s38 = sadd.s32 1, %s33
      %p39 = scmp.ge.s32.totalorder %s38, 1
      %s40 = scalar_select %p39, 0, %s38
      %s41 = sadd.s32 1, %s32
      %s42 = scalar_select %p39, %s41, %s32
      %p43 = scmp.ge.s32.totalorder %s42, 2
      %s44 = scalar_select %p43, 0, %s42
      %s45 = ssub.s32 %s32, %s44
      %s46 = ssub.s32 %s33, %s40
      %s47 = sor.u32 %s45, %s46
      %p48 = scmp.eq.s32.totalorder %s47, 0
      %s50 = sadd.s32 %s49, 1
      %s51 = scalar_select %p48, %s49, %s50
      %p54 = pneg %p48
      %p55 = scmp.eq.s32.totalorder %s25, 1
      %p56 = por %p54, %p55
      %p57 = scmp.ne.s32.totalorder %s49, %s52
      %p58 = scmp.eq.s32.totalorder %s25, 0
      %p59 = por %p57, %p58
      %p60 = scmp.ne.s32.totalorder %s49, %s52
      %p61 = scmp.eq.s32.totalorder %s30, 1
      %p62 = por %p60, %p61
      %p63 = scmp.ne.s32.totalorder %s52, %s53
      %p64 = scmp.eq.s32.totalorder %s30, 0
      %p65 = por %p63, %p64
      %p66 = scmp.ne.s32.totalorder %s52, %s53
      %p67 = scmp.eq.s32.totalorder %s31, 1
      %p68 = por %p66, %p67
      %p70 = scmp.ne.s32.totalorder %s53, %s69
      %p71 = scmp.eq.s32.totalorder %s31, 0
      %p72 = por %p70, %p71
      %s73 = ssub.s32 %s32, %s44
      %s74 = ssub.s32 %s33, %s40
      %s75 = sor.u32 %s73, %s74
      %p76 = scmp.eq.s32.totalorder %s75, 0
      %s78 = sadd.s32 %s77, 1
      %s79 = scalar_select %p76, %s77, %s78
      %p82 = pneg %p76
      %p83 = scmp.eq.s32.totalorder %s25, 1
      %p84 = por %p82, %p83
      %p85 = scmp.ne.s32.totalorder %s77, %s80
      %p86 = scmp.eq.s32.totalorder %s25, 0
      %p87 = por %p85, %p86
      %p88 = scmp.ne.s32.totalorder %s77, %s80
      %p89 = scmp.eq.s32.totalorder %s30, 1
      %p90 = por %p88, %p89
      %p91 = scmp.ne.s32.totalorder %s80, %s81
      %p92 = scmp.eq.s32.totalorder %s30, 0
      %p93 = por %p91, %p92
      %p94 = scmp.ne.s32.totalorder %s80, %s81
      %p95 = scmp.eq.s32.totalorder %s31, 1
      %p96 = por %p94, %p95
      %p98 = scmp.ne.s32.totalorder %s81, %s97
      %p99 = scmp.eq.s32.totalorder %s31, 0
      %p100 = por %p98, %p99
      %s101 = ssub.s32 %s32, %s44
      %p102 = scmp.eq.s32.totalorder %s101, 0
      %s104 = sadd.s32 %s103, 1
      %s105 = scalar_select %p102, %s103, %s104
      %p108 = pneg %p102
      %p109 = scmp.eq.s32.totalorder %s25, 1
      %p110 = por %p108, %p109
      %p111 = scmp.ne.s32.totalorder %s103, %s106
      %p112 = scmp.eq.s32.totalorder %s25, 0
      %p113 = por %p111, %p112
      %p114 = scmp.ne.s32.totalorder %s103, %s106
      %p115 = scmp.eq.s32.totalorder %s30, 1
      %p116 = por %p114, %p115
      %p117 = scmp.ne.s32.totalorder %s106, %s107
      %p118 = scmp.eq.s32.totalorder %s30, 0
      %p119 = por %p117, %p118
      %p120 = scmp.ne.s32.totalorder %s106, %s107
      %p121 = scmp.eq.s32.totalorder %s31, 1
      %p122 = por %p120, %p121
      %p124 = scmp.ne.s32.totalorder %s107, %s123
      %p125 = scmp.eq.s32.totalorder %s31, 0
      %p126 = por %p124, %p125
      %s127 = ssub.s32 %s32, %s44
      %p128 = scmp.eq.s32.totalorder %s127, 0
      %s130 = sadd.s32 %s129, 1
      %s131 = scalar_select %p128, %s129, %s130
      %p134 = pneg %p128
      %p135 = scmp.eq.s32.totalorder %s25, 1
      %p136 = por %p134, %p135
      %p137 = scmp.ne.s32.totalorder %s129, %s132
      %p138 = scmp.eq.s32.totalorder %s25, 0
      %p139 = por %p137, %p138
      %p140 = scmp.ne.s32.totalorder %s129, %s132
      %p141 = scmp.eq.s32.totalorder %s30, 1
      %p142 = por %p140, %p141
      %p143 = scmp.ne.s32.totalorder %s132, %s133
      %p144 = scmp.eq.s32.totalorder %s30, 0
      %p145 = por %p143, %p144
      %p146 = scmp.ne.s32.totalorder %s132, %s133
      %p147 = scmp.eq.s32.totalorder %s31, 1
      %p148 = por %p146, %p147
      %p150 = scmp.ne.s32.totalorder %s133, %s149
      %p151 = scmp.eq.s32.totalorder %s31, 0
      %p152 = por %p150, %p151
      %s153 = ssub.s32 %s32, %s44
      %s154 = ssub.s32 %s33, %s40
      %s155 = sor.u32 %s153, %s154
      %p156 = scmp.eq.s32.totalorder %s155, 0
      %s158 = sadd.s32 %s157, 1
      %s159 = scalar_select %p156, %s157, %s158
      %p162 = pneg %p156
      %p163 = scmp.eq.s32.totalorder %s25, 1
      %p164 = por %p162, %p163
      %p165 = scmp.ne.s32.totalorder %s157, %s160
      %p166 = scmp.eq.s32.totalorder %s25, 0
      %p167 = por %p165, %p166
      %p168 = scmp.ne.s32.totalorder %s157, %s160
      %p169 = scmp.eq.s32.totalorder %s30, 1
      %p170 = por %p168, %p169
      %p171 = scmp.ne.s32.totalorder %s160, %s161
      %p172 = scmp.eq.s32.totalorder %s30, 0
      %p173 = por %p171, %p172
      %p174 = scmp.ne.s32.totalorder %s160, %s161
      %p175 = scmp.eq.s32.totalorder %s31, 1
      %p176 = por %p174, %p175
      %p178 = scmp.ne.s32.totalorder %s161, %s177
      %p179 = scmp.eq.s32.totalorder %s31, 0
      %p180 = por %p178, %p179
      %s181 = ssub.s32 %s32, %s44
      %s182 = ssub.s32 %s33, %s40
      %s183 = sor.u32 %s181, %s182
      %p184 = scmp.eq.s32.totalorder %s183, 0
      %s186 = sadd.s32 %s185, 1
      %s187 = scalar_select %p184, %s185, %s186
      %p190 = pneg %p184
      %p191 = scmp.eq.s32.totalorder %s25, 1
      %p192 = por %p190, %p191
      %p193 = scmp.ne.s32.totalorder %s185, %s188
      %p194 = scmp.eq.s32.totalorder %s25, 0
      %p195 = por %p193, %p194
      %p196 = scmp.ne.s32.totalorder %s185, %s188
      %p197 = scmp.eq.s32.totalorder %s30, 1
      %p198 = por %p196, %p197
      %p199 = scmp.ne.s32.totalorder %s188, %s189
      %p200 = scmp.eq.s32.totalorder %s30, 0
      %p201 = por %p199, %p200
      %p202 = scmp.ne.s32.totalorder %s188, %s189
      %p203 = scmp.eq.s32.totalorder %s31, 1
      %p204 = por %p202, %p203
      %p206 = scmp.ne.s32.totalorder %s189, %s205
      %p207 = scmp.eq.s32.totalorder %s31, 0
      %p208 = por %p206, %p207
      %p209 = scmp.le.s32.totalorder 1, %s25
      %p210 = scmp.lt.s32.totalorder %s25, 3
      %p211 = pnand %p209, %p210
      %p212 = pneg %p211
      // Predicated region
      $region9: #{tpu_custom_call.1} parent=5 // pred_check
        _
      $region10: #{tpu_custom_call.1} parent=5 // pred_check_branch
        %214 = sbr.rel (%p211) target = $region12
      $region11: #{tpu_custom_call.1} parent=5 // pred_region
        %s215 = ssub.s32 %s25, 1
        // Predicated region
        $region13: #{tpu_custom_call.1} parent=11 // pred_check
          %p216 = pneg %p119
        $region14: #{tpu_custom_call.1} parent=11 // pred_check_branch
          %218 = sbr.rel (%p216) target = $region16
        $region15: #{tpu_custom_call.1} parent=11 // pred_region
          %s220 = ssub.s32 128, 128
          %221 = vsyncadd [#allocation6], %s220
          %s222 = smul.addr %s34, 128
          %s223 = scalar_lea.hbm %s2, %s222
          %s225 = sshll.u32 [#allocation7], 4
          %s226 = int_to_ptr.vmem [resolvable:$true] %s225
          %228 = dma.hbm_to_vmem [thread:$0]  %s223, 128, %s226, [#allocation6]
        $region16: #{tpu_custom_call.1} parent=11 // pred_fallthru
          _
        // Predicated region
        $region17: #{tpu_custom_call.1} parent=11 // pred_check
          %p229 = pneg %p145
        $region18: #{tpu_custom_call.1} parent=11 // pred_check_branch
          %231 = sbr.rel (%p229) target = $region20
        $region19: #{tpu_custom_call.1} parent=11 // pred_region
          %s233 = ssub.s32 128, 128
          %234 = vsyncadd [#allocation9], %s233
          %s235 = smul.addr %s34, 128
          %s236 = scalar_lea.hbm %s3, %s235
          %s238 = sshll.u32 [#allocation8], 4
          %s239 = int_to_ptr.vmem [resolvable:$true] %s238
          %241 = dma.hbm_to_vmem [thread:$0]  %s236, 128, %s239, [#allocation9]
        $region20: #{tpu_custom_call.1} parent=11 // pred_fallthru
          _
      $region12: #{tpu_custom_call.1} parent=5 // pred_fallthru
        _
      %p242 = scmp.lt.s32.totalorder %s25, 2
      // Predicated region
      $region21: #{tpu_custom_call.1} parent=5 // pred_check
        %p243 = pneg %p242
      $region22: #{tpu_custom_call.1} parent=5 // pred_check_branch
        %245 = sbr.rel (%p243) target = $region24
      $region23: #{tpu_custom_call.1} parent=5 // pred_region
        // Predicated region
        $region25: #{tpu_custom_call.1} parent=23 // pred_check
          %p246 = pneg %p59
        $region26: #{tpu_custom_call.1} parent=23 // pred_check_branch
          %248 = sbr.rel (%p246) target = $region28
        $region27: #{tpu_custom_call.1} parent=23 // pred_region
          %s249 = sand.u32 %s49, 1
          %s250 = scalar_lea.sflag [#allocation3], %s249
          %s251 = sand.u32 %s49, 1
          %s252 = smul.addr %s251, 2
          %s253 = scalar_lea.vmem [#allocation2], %s252
          %s255 = ssub.s32 32, 32
          %256 = vsyncadd %s250, %s255
          %s257 = sadd.s32 %s33, %s32
          %s258 = smul.addr %s257, 32
          %s259 = scalar_lea.hbm %s0, %s258
          %s261 = sshll.u32 %s253, 4
          %s262 = int_to_ptr.vmem [resolvable:$true] %s261
          %264 = dma.hbm_to_vmem [thread:$0]  %s259, 32, %s262, %s250
        $region28: #{tpu_custom_call.1} parent=23 // pred_fallthru
          _
        // Predicated region
        $region29: #{tpu_custom_call.1} parent=23 // pred_check
          %p265 = pneg %p87
        $region30: #{tpu_custom_call.1} parent=23 // pred_check_branch
          %267 = sbr.rel (%p265) target = $region32
        $region31: #{tpu_custom_call.1} parent=23 // pred_region
          %s268 = sand.u32 %s25, 1
          %s269 = scalar_lea.sflag [#allocation6], %s268
          %s270 = sand.u32 %s77, 1
          %s271 = smul.addr %s270, 8
          %s272 = scalar_lea.vmem [#allocation5], %s271
          %s274 = ssub.s32 128, 128
          %275 = vsyncadd %s269, %s274
          %s276 = sadd.s32 %s33, %s32
          %s277 = smul.addr %s276, 128
          %s278 = scalar_lea.hbm %s1, %s277
          %s280 = sshll.u32 %s272, 4
          %s281 = int_to_ptr.vmem [resolvable:$true] %s280
          %283 = dma.hbm_to_vmem [thread:$0]  %s278, 128, %s281, %s269
        $region32: #{tpu_custom_call.1} parent=23 // pred_fallthru
          _
      $region24: #{tpu_custom_call.1} parent=5 // pred_fallthru
        _
      %p284 = scmp.le.s32.totalorder 1, %s25
      %p285 = scmp.lt.s32.totalorder %s25, 3
      %p286 = pnand %p284, %p285
      %p287 = pneg %p286
      // Predicated region
      $region33: #{tpu_custom_call.1} parent=5 // pred_check
        _
      $region34: #{tpu_custom_call.1} parent=5 // pred_check_branch
        %289 = sbr.rel (%p286) target = $region36
      $region35: #{tpu_custom_call.1} parent=5 // pred_region
        %s290 = ssub.s32 %s25, 1
        %s291 = sand.u32 %s52, 1
        %s292 = scalar_lea.sflag [#allocation3], %s291
        %s293 = sand.u32 %s52, 1
        %s294 = smul.addr %s293, 2
        %s295 = scalar_lea.vmem [#allocation2], %s294
        // Predicated region
        $region37: #{tpu_custom_call.1} parent=35 // pred_check
          %p296 = pneg %p65
        $region38: #{tpu_custom_call.1} parent=35 // pred_check_branch
          %298 = sbr.rel (%p296) target = $region40
        $region39: #{tpu_custom_call.1} parent=35 // pred_region
          %299 = dma.done %s292, 32
        $region40: #{tpu_custom_call.1} parent=35 // pred_fallthru
          _
        %s300 = sand.u32 %s30, 1
        %s301 = scalar_lea.sflag [#allocation6], %s300
        %s302 = sand.u32 %s80, 1
        %s303 = smul.addr %s302, 8
        %s304 = scalar_lea.vmem [#allocation5], %s303
        // Predicated region
        $region41: #{tpu_custom_call.1} parent=35 // pred_check
          %p305 = pneg %p93
        $region42: #{tpu_custom_call.1} parent=35 // pred_check_branch
          %307 = sbr.rel (%p305) target = $region44
        $region43: #{tpu_custom_call.1} parent=35 // pred_region
          %308 = dma.done %s301, 128
        $region44: #{tpu_custom_call.1} parent=35 // pred_fallthru
          _
        // Predicated region
        $region45: #{tpu_custom_call.1} parent=35 // pred_check
          %p309 = pneg %p119
        $region46: #{tpu_custom_call.1} parent=35 // pred_check_branch
          %311 = sbr.rel (%p309) target = $region48
        $region47: #{tpu_custom_call.1} parent=35 // pred_region
          %312 = dma.done [#allocation6], 128
        $region48: #{tpu_custom_call.1} parent=35 // pred_fallthru
          _
        // Predicated region
        $region49: #{tpu_custom_call.1} parent=35 // pred_check
          %p313 = pneg %p145
        $region50: #{tpu_custom_call.1} parent=35 // pred_check_branch
          %315 = sbr.rel (%p313) target = $region52
        $region51: #{tpu_custom_call.1} parent=35 // pred_region
          %316 = dma.done [#allocation9], 128
        $region52: #{tpu_custom_call.1} parent=35 // pred_fallthru
          _
        %s317 = sand.u32 %s52, 1
        %s318 = scalar_lea.sflag [#allocation3], %s317
        %s319 = sand.u32 %s52, 1
        %s320 = smul.addr %s319, 2
        %s321 = scalar_lea.vmem [#allocation2], %s320
        %p322 = pneg %p65
        %p323 = pneg %p62
        %s324 = sand.u32 %s30, 1
        %s325 = scalar_lea.sflag [#allocation6], %s324
        %s326 = sand.u32 %s80, 1
        %s327 = smul.addr %s326, 8
        %s328 = scalar_lea.vmem [#allocation5], %s327
        %p329 = pneg %p93
        %p330 = pneg %p90
        %p331 = pneg %p119
        %p332 = pneg %p116
        %p333 = pneg %p145
        %p334 = pneg %p142
        %p335 = pneg %p173
        %p336 = pneg %p170
        %s337 = sand.u32 %s160, 1
        %s338 = scalar_lea.sflag [#allocation4], %s337
        %s339 = sand.u32 %s160, 1
        %s340 = smul.addr %s339, 8
        %s341 = scalar_lea.vmem [#allocation10], %s340
        %p342 = pneg %p201
        %p343 = pneg %p198
        %s344 = sand.u32 %s188, 1
        %s345 = scalar_lea.sflag [#allocation12], %s344
        %s346 = sand.u32 %s188, 1
        %s347 = smul.addr %s346, 8
        %s348 = scalar_lea.vmem [#allocation11], %s347
        %v351 = vld [vmem:[%s304] sm:$0xff]
        %v352 = vld [vmem:[#allocation7] sm:$0xff]
        %v353 = vld [vmem:[#allocation8] sm:$0xff]
        %v354 = vmul.f32 %v351, 0.17677669
        %vm355 = vcmask 261120
        %v357 = vsel %vm355, %v354, 0
        %v360 = vsel %vm355, %v352, 0
        %362 = vmatprep.subr.mxu0 0.0
        %363 = vmatpush1.xpose.msra.mxu0 %v360
        %364 = vmatprep.subr.mxu0 0.0
        %365 = vmatpush1.xpose.msra.mxu0 0.0
        %366 = vmatprep.subr.mxu0 0.0
        %367 = vmatpush1.xpose.msra.mxu0 0.0
        %368 = vmatprep.subr.mxu0 0.0
        %369 = vmatpush1.xpose.msra.mxu0 0.0
        %370 = vmatprep.subr.mxu0 0.0
        %371 = vmatpush1.xpose.msra.mxu0 0.0
        %372 = vmatprep.subr.mxu0 0.0
        %373 = vmatpush1.xpose.msra.mxu0 0.0
        %374 = vmatprep.subr.mxu0 0.0
        %375 = vmatpush1.xpose.msra.mxu0 0.0
        %376 = vmatprep.subr.mxu0 0.0
        %377 = vmatpush1.xpose.msra.mxu0 0.0
        %378 = vmatprep.subr.mxu0 0.0
        %379 = vmatpush1.xpose.msra.mxu0 0.0
        %380 = vmatprep.subr.mxu0 0.0
        %381 = vmatpush1.xpose.msra.mxu0 0.0
        %382 = vmatprep.subr.mxu0 0.0
        %383 = vmatpush1.xpose.msra.mxu0 0.0
        %384 = vmatprep.subr.mxu0 0.0
        %385 = vmatpush1.xpose.msra.mxu0 0.0
        %386 = vmatprep.subr.mxu0 0.0
        %387 = vmatpush1.xpose.msra.mxu0 0.0
        %388 = vmatprep.subr.mxu0 0.0
        %389 = vmatpush1.xpose.msra.mxu0 0.0
        %390 = vmatprep.subr.mxu0 0.0
        %391 = vmatpush1.xpose.msra.mxu0 0.0
        %392 = vmatprep.subr.mxu0 0.0
        %393 = vmatpush1.xpose.msra.mxu0 0.0
        %394 = vmatprep.subr.mxu0 0.0
        %395 = vmatpush1.xpose.msra.mxu0 0.0
        %396 = vmatprep.subr.mxu0 0.0
        %397 = vmatpush1.xpose.msra.mxu0 0.0
        %398 = vmatprep.subr.mxu0 0.0
        %399 = vmatpush1.xpose.msra.mxu0 0.0
        %400 = vmatprep.subr.mxu0 0.0
        %401 = vmatpush1.xpose.msra.mxu0 0.0
        %402 = vmatprep.subr.mxu0 0.0
        %403 = vmatpush1.xpose.msra.mxu0 0.0
        %404 = vmatprep.subr.mxu0 0.0
        %405 = vmatpush1.xpose.msra.mxu0 0.0
        %406 = vmatprep.subr.mxu0 0.0
        %407 = vmatpush1.xpose.msra.mxu0 0.0
        %408 = vmatprep.subr.mxu0 0.0
        %409 = vmatpush1.xpose.msra.mxu0 0.0
        %410 = vmatprep.subr.mxu0 0.0
        %411 = vmatpush1.xpose.msra.mxu0 0.0
        %412 = vmatprep.subr.mxu0 0.0
        %413 = vmatpush1.xpose.msra.mxu0 0.0
        %414 = vmatprep.subr.mxu0 0.0
        %415 = vmatpush1.xpose.msra.mxu0 0.0
        %416 = vmatprep.subr.mxu0 0.0
        %417 = vmatpush1.xpose.msra.mxu0 0.0
        %418 = vmatprep.subr.mxu0 0.0
        %419 = vmatpush1.xpose.msra.mxu0 0.0
        %420 = vmatprep.subr.mxu0 0.0
        %421 = vmatpush1.xpose.msra.mxu0 0.0
        %422 = vmatprep.subr.mxu0 0.0
        %423 = vmatpush1.xpose.msra.mxu0 0.0
        %424 = vmatprep.subr.mxu0 0.0
        %425 = vmatpush1.xpose.msra.mxu0 0.0
        %426 = vmatprep.mubr.f32.mxu0 0.0
        %427 = vmatmul.mubr.f32.gmra.mrb[0].mxu0 %v357
        %v428 = vpop.f32.mrb[0].mxu0
        %v429 = vadd.f32 0.0, %v428
        %v430 = vpop.f32.mrb[0].mxu0
        %431 = vdwg.mxu0
        %v432 = vld [vmem:[%s295] sm:$0x3]
        %vm433 = vnez %v432
        %v434 = vsel %vm433, 16843009, 0
        %v435 = vunpack.c.0.s8 %v434
        %vm436 = vcmp.ne.s32.totalorder %v435, 0
        %v437 = vsel %vm436, -1000000.0, %v429
        %vm438 = vcmask 64512
        %v439 = vsel %vm438, %v437, -inf
        %440 = vmax.xlane.f32.xlu0 %v439
        %v441 = vpop.xlane.xlu0 %440
        %v442 = vsub.f32 %v437, %v441
        %v443 = vmul.f32 %v442, 1.442695
        %v444 = vpow.pop %v443
        %v445 = vsel %vm438, %v444, 0.0
        %446 = vadd.xlane.f32.xlu0 %v445
        %v447 = vpop.xlane.xlu0 %446
        %v448 = vrcp.pop %v447
        %v449 = vmul.f32 %v444, %v448
        %450 = vst.msk [vmem:[%s348] sm:$0xff] %vm438, %v449
        %v452 = vsel %vm438, %v449, 0
        %454 = vmatprep.subr.mxu0 0.0
        %455 = vmatpush1.msra.mxu0 %v353
        %456 = vmatprep.subr.mxu0 0.0
        %457 = vmatpush1.msra.mxu0 0.0
        %458 = vmatprep.subr.mxu0 0.0
        %459 = vmatpush1.msra.mxu0 0.0
        %460 = vmatprep.subr.mxu0 0.0
        %461 = vmatpush1.msra.mxu0 0.0
        %462 = vmatprep.subr.mxu0 0.0
        %463 = vmatpush1.msra.mxu0 0.0
        %464 = vmatprep.subr.mxu0 0.0
        %465 = vmatpush1.msra.mxu0 0.0
        %466 = vmatprep.subr.mxu0 0.0
        %467 = vmatpush1.msra.mxu0 0.0
        %468 = vmatprep.subr.mxu0 0.0
        %469 = vmatpush1.msra.mxu0 0.0
        %470 = vmatprep.subr.mxu0 0.0
        %471 = vmatpush1.msra.mxu0 0.0
        %472 = vmatprep.subr.mxu0 0.0
        %473 = vmatpush1.msra.mxu0 0.0
        %474 = vmatprep.subr.mxu0 0.0
        %475 = vmatpush1.msra.mxu0 0.0
        %476 = vmatprep.subr.mxu0 0.0
        %477 = vmatpush1.msra.mxu0 0.0
        %478 = vmatprep.subr.mxu0 0.0
        %479 = vmatpush1.msra.mxu0 0.0
        %480 = vmatprep.subr.mxu0 0.0
        %481 = vmatpush1.msra.mxu0 0.0
        %482 = vmatprep.subr.mxu0 0.0
        %483 = vmatpush1.msra.mxu0 0.0
        %484 = vmatprep.subr.mxu0 0.0
        %485 = vmatpush1.msra.mxu0 0.0
        %486 = vmatprep.subr.mxu0 0.0
        %487 = vmatpush1.msra.mxu0 0.0
        %488 = vmatprep.subr.mxu0 0.0
        %489 = vmatpush1.msra.mxu0 0.0
        %490 = vmatprep.subr.mxu0 0.0
        %491 = vmatpush1.msra.mxu0 0.0
        %492 = vmatprep.subr.mxu0 0.0
        %493 = vmatpush1.msra.mxu0 0.0
        %494 = vmatprep.subr.mxu0 0.0
        %495 = vmatpush1.msra.mxu0 0.0
        %496 = vmatprep.subr.mxu0 0.0
        %497 = vmatpush1.msra.mxu0 0.0
        %498 = vmatprep.subr.mxu0 0.0
        %499 = vmatpush1.msra.mxu0 0.0
        %500 = vmatprep.subr.mxu0 0.0
        %501 = vmatpush1.msra.mxu0 0.0
        %502 = vmatprep.subr.mxu0 0.0
        %503 = vmatpush1.msra.mxu0 0.0
        %504 = vmatprep.subr.mxu0 0.0
        %505 = vmatpush1.msra.mxu0 0.0
        %506 = vmatprep.subr.mxu0 0.0
        %507 = vmatpush1.msra.mxu0 0.0
        %508 = vmatprep.subr.mxu0 0.0
        %509 = vmatpush1.msra.mxu0 0.0
        %510 = vmatprep.subr.mxu0 0.0
        %511 = vmatpush1.msra.mxu0 0.0
        %512 = vmatprep.subr.mxu0 0.0
        %513 = vmatpush1.msra.mxu0 0.0
        %514 = vmatprep.subr.mxu0 0.0
        %515 = vmatpush1.msra.mxu0 0.0
        %516 = vmatprep.subr.mxu0 0.0
        %517 = vmatpush1.msra.mxu0 0.0
        %518 = vmatprep.mubr.f32.mxu0 0.0
        %519 = vmatmul.mubr.f32.gmra.mrb[0].mxu0 %v452
        %v520 = vpop.f32.mrb[0].mxu0
        %v521 = vadd.f32 0.0, %v520
        %v522 = vpop.f32.mrb[0].mxu0
        %523 = vdwg.mxu0
        %524 = vst.msk [vmem:[%s341] sm:$0xff] %vm355, %v521
        %s525 = sand.u32 %s160, 1
        %s526 = scalar_lea.sflag [#allocation4], %s525
        %s527 = sand.u32 %s160, 1
        %s528 = smul.addr %s527, 8
        %s529 = scalar_lea.vmem [#allocation10], %s528
        %s530 = sand.u32 %s188, 1
        %s531 = scalar_lea.sflag [#allocation12], %s530
        %s532 = sand.u32 %s188, 1
        %s533 = smul.addr %s532, 8
        %s534 = scalar_lea.vmem [#allocation11], %s533
        // Predicated region
        $region53: #{tpu_custom_call.1} parent=35 // pred_check
          %p535 = pneg %p170
        $region54: #{tpu_custom_call.1} parent=35 // pred_check_branch
          %537 = sbr.rel (%p535) target = $region56
        $region55: #{tpu_custom_call.1} parent=35 // pred_region
          %s539 = ssub.s32 128, 128
          %540 = vsyncadd %s526, %s539
          %s541 = sadd.s32 %s35, %s34
          %s542 = smul.addr %s541, 128
          %s543 = scalar_lea.hbm %s4, %s542
          %s545 = sshll.u32 %s529, 4
          %s546 = int_to_ptr.vmem [resolvable:$true] %s545
          %548 = dma.vmem_to_hbm [thread:$0]  %s546, 128, %s543, %s526
        $region56: #{tpu_custom_call.1} parent=35 // pred_fallthru
          _
        // Predicated region
        $region57: #{tpu_custom_call.1} parent=35 // pred_check
          %p549 = pneg %p198
        $region58: #{tpu_custom_call.1} parent=35 // pred_check_branch
          %551 = sbr.rel (%p549) target = $region60
        $region59: #{tpu_custom_call.1} parent=35 // pred_region
          %s553 = ssub.s32 128, 128
          %554 = vsyncadd %s531, %s553
          %s555 = sadd.s32 %s35, %s34
          %s556 = smul.addr %s555, 128
          %s557 = scalar_lea.hbm %s5, %s556
          %s559 = sshll.u32 %s534, 4
          %s560 = int_to_ptr.vmem [resolvable:$true] %s559
          %562 = dma.vmem_to_hbm [thread:$0]  %s560, 128, %s557, %s531
        $region60: #{tpu_custom_call.1} parent=35 // pred_fallthru
          _
      $region36: #{tpu_custom_call.1} parent=5 // pred_fallthru
        _
      %p563 = scmp.le.s32.totalorder 2, %s25
      // Predicated region
      $region61: #{tpu_custom_call.1} parent=5 // pred_check
        %p564 = pneg %p563
      $region62: #{tpu_custom_call.1} parent=5 // pred_check_branch
        %566 = sbr.rel (%p564) target = $region64
      $region63: #{tpu_custom_call.1} parent=5 // pred_region
        %s567 = ssub.s32 %s25, 2
        // Predicated region
        $region65: #{tpu_custom_call.1} parent=63 // pred_check
          %p568 = pneg %p176
        $region66: #{tpu_custom_call.1} parent=63 // pred_check_branch
          %570 = sbr.rel (%p568) target = $region68
        $region67: #{tpu_custom_call.1} parent=63 // pred_region
          %s571 = sand.u32 %s161, 1
          %s572 = scalar_lea.sflag [#allocation4], %s571
          %s573 = sand.u32 %s161, 1
          %s574 = smul.addr %s573, 8
          %s575 = scalar_lea.vmem [#allocation10], %s574
          %576 = dma.done %s572, 128
        $region68: #{tpu_custom_call.1} parent=63 // pred_fallthru
          _
        // Predicated region
        $region69: #{tpu_custom_call.1} parent=63 // pred_check
          %p577 = pneg %p204
        $region70: #{tpu_custom_call.1} parent=63 // pred_check_branch
          %579 = sbr.rel (%p577) target = $region72
        $region71: #{tpu_custom_call.1} parent=63 // pred_region
          %s580 = sand.u32 %s189, 1
          %s581 = scalar_lea.sflag [#allocation12], %s580
          %s582 = sand.u32 %s189, 1
          %s583 = smul.addr %s582, 8
          %s584 = scalar_lea.vmem [#allocation11], %s583
          %585 = dma.done %s581, 128
        $region72: #{tpu_custom_call.1} parent=63 // pred_fallthru
          _
      $region64: #{tpu_custom_call.1} parent=5 // pred_fallthru
        _
    $region6: #{tpu_custom_call.1} parent=1 // loop_footer
      %s29 = sadd.s32 1, %s25
    $region7: #{tpu_custom_call.1} parent=1 // loop_footer_branch
      %24 = sbr.rel target = $region3
    $region8: #{tpu_custom_call.1} parent=1 // loop_exit
      _
    %586 = vsyncpa [#allocation3], 1
    %s587 = scalar_lea.sflag [#allocation3], 1
    %588 = vsyncpa %s587, 1
    %589 = vsyncpa [#allocation6], 1
    %s590 = scalar_lea.sflag [#allocation6], 1
    %591 = vsyncpa %s590, 1
    %592 = vsyncpa [#allocation9], 1
    %593 = vsyncpa [#allocation4], 1
    %s594 = scalar_lea.sflag [#allocation4], 1
    %595 = vsyncpa %s594, 1
    %596 = vsyncpa [#allocation12], 1
    %s597 = scalar_lea.sflag [#allocation12], 1
    %598 = vsyncpa %s597, 1

// kernel: tpu_custom_call.1
$region0: #{tpu_custom_call.1}
  #allocation0 [shape = 'u32[]', space=smem, size = 0x4, offset = 0x4, fixed_abs, tag = 'smem constant byte address 0x4 - core index']
  #allocation1 [shape = 'u32[144,128]{1,0:T(1,128)}', space=vmem, size = 0x12000, scoped, tag = 'internal scratch']
  %s0 = inlined_call_operand.hbm [shape: s8[2,8,8], index: 0, kind: input, shape index: {}]
  %s1 = inlined_call_operand.hbm [shape: f32[2,8,32], index: 1, kind: input, shape index: {}]
  %s2 = inlined_call_operand.hbm [shape: f32[2,8,32], index: 2, kind: input, shape index: {}]
  %s3 = inlined_call_operand.hbm [shape: f32[2,8,32], index: 3, kind: input, shape index: {}]
  %s4 = inlined_call_operand.hbm [shape: f32[2,8,32], index: 4, kind: output, shape index: {0}]
  %s5 = inlined_call_operand.hbm [shape: f32[2,8,8], index: 5, kind: output, shape index: {1}]
  %6 = xla_tuple %s4, %s5
  %s7 = sld [smem:[#allocation0]]
  $region73: #{tpu_custom_call.1} parent=0
    _
  %s9 = ssub.s32 1, %s7
  %s10 = scalar_select 0, %s9, %s7
  $region1: #{tpu_custom_call.1} parent=0
    #allocation2 [shape = 'u8[2048]{0}', space=vmem, size = 0x800, scoped, tag = 'input window, operand 0']
    #allocation3 [shape = 's32[2]{0}', space=sflag, size = 0x8, scoped, tag = 'scoped memory for tpu_custom_call.1']
    #allocation4 [shape = 's32[2]{0}', space=sflag, size = 0x8, scoped, tag = 'scoped memory for tpu_custom_call.1']
    #allocation5 [shape = 'u8[8192]{0}', space=vmem, size = 0x2000, scoped, tag = 'input window, operand 1']
    #allocation6 [shape = 's32[2]{0}', space=sflag, size = 0x8, scoped, tag = 'scoped memory for tpu_custom_call.1']
    #allocation7 [shape = 'u8[8192]{0}', space=vmem, size = 0x2000, scoped, tag = 'input window, operand 2']
    #allocation8 [shape = 'u8[8192]{0}', space=vmem, size = 0x2000, scoped, tag = 'input window, operand 3']
    #allocation9 [shape = 's32[2]{0}', space=sflag, size = 0x8, scoped, tag = 'scoped memory for tpu_custom_call.1']
    #allocation10 [shape = 'u8[8192]{0}', space=vmem, size = 0x2000, scoped, tag = 'output window, operand 0']
    #allocation11 [shape = 'u8[8192]{0}', space=vmem, size = 0x2000, scoped, tag = 'output window, operand 1']
    #allocation12 [shape = 's32[2]{0}', space=sflag, size = 0x8, scoped, tag = 'scoped memory for tpu_custom_call.1']
    %11 = vsyncpa [#allocation3], 0
    %s12 = scalar_lea.sflag [#allocation3], 1
    %13 = vsyncpa %s12, 0
    %14 = vsyncpa [#allocation6], 0
    %s15 = scalar_lea.sflag [#allocation6], 1
    %16 = vsyncpa %s15, 0
    %17 = vsyncpa [#allocation9], 0
    %s18 = scalar_lea.sflag [#allocation9], 1
    %19 = vsyncpa %s18, 0
    %20 = vsyncpa [#allocation4], 0
    %s21 = scalar_lea.sflag [#allocation4], 1
    %22 = vsyncpa %s21, 0
    %23 = vsyncpa [#allocation12], 0
    %s24 = scalar_lea.sflag [#allocation12], 1
    %25 = vsyncpa %s24, 0
    loop: start=0, step=1, limit=4
    $region2: #{tpu_custom_call.1} parent=1 // loop_pre_header
      _
    $region3: #{tpu_custom_call.1} parent=1 // loop_header
      %s27 = sphi 0, %s31
      %p28 = scmp.ge.s32.totalorder %s27, 4
      %s34 = sphi 0, %s46
      %s35 = sphi 0, %s42
      %s36 = sphi 0, %s34
      %s37 = sphi 0, %s35
      %s38 = sphi 0, %s36
      %s39 = sphi 0, %s37
      %s51 = sphi 0, %s53
      %s54 = sphi 0, %s51
      %s55 = sphi 0, %s54
      %s71 = sphi 0, %s55
      %s79 = sphi 0, %s81
      %s82 = sphi 0, %s79
      %s83 = sphi 0, %s82
      %s99 = sphi 0, %s83
      %s105 = sphi 0, %s107
      %s108 = sphi 0, %s105
      %s109 = sphi 0, %s108
      %s125 = sphi 0, %s109
      %s131 = sphi 0, %s133
      %s134 = sphi 0, %s131
      %s135 = sphi 0, %s134
      %s151 = sphi 0, %s135
      %s159 = sphi 0, %s161
      %s162 = sphi 0, %s159
      %s163 = sphi 0, %s162
      %s179 = sphi 0, %s163
      %s187 = sphi 0, %s189
      %s190 = sphi 0, %s187
      %s191 = sphi 0, %s190
      %s207 = sphi 0, %s191
    $region4: #{tpu_custom_call.1} parent=1 // loop_header_branch
      %30 = sbr.rel (%p28) target = $region8
    $region5: #{tpu_custom_call.1} parent=1 // loop_body
      %s32 = ssub.s32 %s27, 1
      %s33 = ssub.s32 %s27, 2
      %s40 = sadd.s32 1, %s35
      %p41 = scmp.ge.s32.totalorder %s40, 1
      %s42 = scalar_select %p41, 0, %s40
      %s43 = sadd.s32 1, %s34
      %s44 = scalar_select %p41, %s43, %s34
      %p45 = scmp.ge.s32.totalorder %s44, 2
      %s46 = scalar_select %p45, 0, %s44
      %s47 = ssub.s32 %s34, %s46
      %s48 = ssub.s32 %s35, %s42
      %s49 = sor.u32 %s47, %s48
      %p50 = scmp.eq.s32.totalorder %s49, 0
      %s52 = sadd.s32 %s51, 1
      %s53 = scalar_select %p50, %s51, %s52
      %p56 = pneg %p50
      %p57 = scmp.eq.s32.totalorder %s27, 1
      %p58 = por %p56, %p57
      %p59 = scmp.ne.s32.totalorder %s51, %s54
      %p60 = scmp.eq.s32.totalorder %s27, 0
      %p61 = por %p59, %p60
      %p62 = scmp.ne.s32.totalorder %s51, %s54
      %p63 = scmp.eq.s32.totalorder %s32, 1
      %p64 = por %p62, %p63
      %p65 = scmp.ne.s32.totalorder %s54, %s55
      %p66 = scmp.eq.s32.totalorder %s32, 0
      %p67 = por %p65, %p66
      %p68 = scmp.ne.s32.totalorder %s54, %s55
      %p69 = scmp.eq.s32.totalorder %s33, 1
      %p70 = por %p68, %p69
      %p72 = scmp.ne.s32.totalorder %s55, %s71
      %p73 = scmp.eq.s32.totalorder %s33, 0
      %p74 = por %p72, %p73
      %s75 = ssub.s32 %s34, %s46
      %s76 = ssub.s32 %s35, %s42
      %s77 = sor.u32 %s75, %s76
      %p78 = scmp.eq.s32.totalorder %s77, 0
      %s80 = sadd.s32 %s79, 1
      %s81 = scalar_select %p78, %s79, %s80
      %p84 = pneg %p78
      %p85 = scmp.eq.s32.totalorder %s27, 1
      %p86 = por %p84, %p85
      %p87 = scmp.ne.s32.totalorder %s79, %s82
      %p88 = scmp.eq.s32.totalorder %s27, 0
      %p89 = por %p87, %p88
      %p90 = scmp.ne.s32.totalorder %s79, %s82
      %p91 = scmp.eq.s32.totalorder %s32, 1
      %p92 = por %p90, %p91
      %p93 = scmp.ne.s32.totalorder %s82, %s83
      %p94 = scmp.eq.s32.totalorder %s32, 0
      %p95 = por %p93, %p94
      %p96 = scmp.ne.s32.totalorder %s82, %s83
      %p97 = scmp.eq.s32.totalorder %s33, 1
      %p98 = por %p96, %p97
      %p100 = scmp.ne.s32.totalorder %s83, %s99
      %p101 = scmp.eq.s32.totalorder %s33, 0
      %p102 = por %p100, %p101
      %s103 = ssub.s32 %s34, %s46
      %p104 = scmp.eq.s32.totalorder %s103, 0
      %s106 = sadd.s32 %s105, 1
      %s107 = scalar_select %p104, %s105, %s106
      %p110 = pneg %p104
      %p111 = scmp.eq.s32.totalorder %s27, 1
      %p112 = por %p110, %p111
      %p113 = scmp.ne.s32.totalorder %s105, %s108
      %p114 = scmp.eq.s32.totalorder %s27, 0
      %p115 = por %p113, %p114
      %p116 = scmp.ne.s32.totalorder %s105, %s108
      %p117 = scmp.eq.s32.totalorder %s32, 1
      %p118 = por %p116, %p117
      %p119 = scmp.ne.s32.totalorder %s108, %s109
      %p120 = scmp.eq.s32.totalorder %s32, 0
      %p121 = por %p119, %p120
      %p122 = scmp.ne.s32.totalorder %s108, %s109
      %p123 = scmp.eq.s32.totalorder %s33, 1
      %p124 = por %p122, %p123
      %p126 = scmp.ne.s32.totalorder %s109, %s125
      %p127 = scmp.eq.s32.totalorder %s33, 0
      %p128 = por %p126, %p127
      %s129 = ssub.s32 %s34, %s46
      %p130 = scmp.eq.s32.totalorder %s129, 0
      %s132 = sadd.s32 %s131, 1
      %s133 = scalar_select %p130, %s131, %s132
      %p136 = pneg %p130
      %p137 = scmp.eq.s32.totalorder %s27, 1
      %p138 = por %p136, %p137
      %p139 = scmp.ne.s32.totalorder %s131, %s134
      %p140 = scmp.eq.s32.totalorder %s27, 0
      %p141 = por %p139, %p140
      %p142 = scmp.ne.s32.totalorder %s131, %s134
      %p143 = scmp.eq.s32.totalorder %s32, 1
      %p144 = por %p142, %p143
      %p145 = scmp.ne.s32.totalorder %s134, %s135
      %p146 = scmp.eq.s32.totalorder %s32, 0
      %p147 = por %p145, %p146
      %p148 = scmp.ne.s32.totalorder %s134, %s135
      %p149 = scmp.eq.s32.totalorder %s33, 1
      %p150 = por %p148, %p149
      %p152 = scmp.ne.s32.totalorder %s135, %s151
      %p153 = scmp.eq.s32.totalorder %s33, 0
      %p154 = por %p152, %p153
      %s155 = ssub.s32 %s34, %s46
      %s156 = ssub.s32 %s35, %s42
      %s157 = sor.u32 %s155, %s156
      %p158 = scmp.eq.s32.totalorder %s157, 0
      %s160 = sadd.s32 %s159, 1
      %s161 = scalar_select %p158, %s159, %s160
      %p164 = pneg %p158
      %p165 = scmp.eq.s32.totalorder %s27, 1
      %p166 = por %p164, %p165
      %p167 = scmp.ne.s32.totalorder %s159, %s162
      %p168 = scmp.eq.s32.totalorder %s27, 0
      %p169 = por %p167, %p168
      %p170 = scmp.ne.s32.totalorder %s159, %s162
      %p171 = scmp.eq.s32.totalorder %s32, 1
      %p172 = por %p170, %p171
      %p173 = scmp.ne.s32.totalorder %s162, %s163
      %p174 = scmp.eq.s32.totalorder %s32, 0
      %p175 = por %p173, %p174
      %p176 = scmp.ne.s32.totalorder %s162, %s163
      %p177 = scmp.eq.s32.totalorder %s33, 1
      %p178 = por %p176, %p177
      %p180 = scmp.ne.s32.totalorder %s163, %s179
      %p181 = scmp.eq.s32.totalorder %s33, 0
      %p182 = por %p180, %p181
      %s183 = ssub.s32 %s34, %s46
      %s184 = ssub.s32 %s35, %s42
      %s185 = sor.u32 %s183, %s184
      %p186 = scmp.eq.s32.totalorder %s185, 0
      %s188 = sadd.s32 %s187, 1
      %s189 = scalar_select %p186, %s187, %s188
      %p192 = pneg %p186
      %p193 = scmp.eq.s32.totalorder %s27, 1
      %p194 = por %p192, %p193
      %p195 = scmp.ne.s32.totalorder %s187, %s190
      %p196 = scmp.eq.s32.totalorder %s27, 0
      %p197 = por %p195, %p196
      %p198 = scmp.ne.s32.totalorder %s187, %s190
      %p199 = scmp.eq.s32.totalorder %s32, 1
      %p200 = por %p198, %p199
      %p201 = scmp.ne.s32.totalorder %s190, %s191
      %p202 = scmp.eq.s32.totalorder %s32, 0
      %p203 = por %p201, %p202
      %p204 = scmp.ne.s32.totalorder %s190, %s191
      %p205 = scmp.eq.s32.totalorder %s33, 1
      %p206 = por %p204, %p205
      %p208 = scmp.ne.s32.totalorder %s191, %s207
      %p209 = scmp.eq.s32.totalorder %s33, 0
      %p210 = por %p208, %p209
      %p211 = scmp.le.s32.totalorder 1, %s27
      %p212 = scmp.lt.s32.totalorder %s27, 3
      %p213 = pnand %p211, %p212
      %p214 = pneg %p213
      // Predicated region
      $region9: #{tpu_custom_call.1} parent=5 // pred_check
        _
      $region10: #{tpu_custom_call.1} parent=5 // pred_check_branch
        %216 = sbr.rel (%p213) target = $region12
      $region11: #{tpu_custom_call.1} parent=5 // pred_region
        %s217 = ssub.s32 %s27, 1
      $region12: #{tpu_custom_call.1} parent=5 // pred_fallthru
        _
      %p218 = scmp.lt.s32.totalorder %s27, 2
      // Predicated region
      $region13: #{tpu_custom_call.1} parent=5 // pred_check
        %p219 = pneg %p218
      $region14: #{tpu_custom_call.1} parent=5 // pred_check_branch
        %221 = sbr.rel (%p219) target = $region16
      $region15: #{tpu_custom_call.1} parent=5 // pred_region
        // Predicated region
        $region17: #{tpu_custom_call.1} parent=15 // pred_check
          %p222 = pneg %p61
        $region18: #{tpu_custom_call.1} parent=15 // pred_check_branch
          %224 = sbr.rel (%p222) target = $region20
        $region19: #{tpu_custom_call.1} parent=15 // pred_region
          %s225 = sand.u32 %s51, 1
          %s226 = scalar_lea.sflag [#allocation3], %s225
          %s227 = sand.u32 %s51, 1
          %s228 = smul.addr %s227, 2
          %s229 = scalar_lea.vmem [#allocation2], %s228
          %s231 = ssub.s32 32, 32
          %232 = vsyncadd %s226, %s231
          %s233 = sadd.s32 %s35, %s34
          %s234 = smul.addr %s233, 32
          %s235 = scalar_lea.hbm %s0, %s234
          %s237 = sshll.u32 %s229, 4
          %s238 = int_to_ptr.vmem [resolvable:$true] %s237
          %240 = dma.hbm_to_vmem [thread:$0]  %s235, 32, %s238, %s226
        $region20: #{tpu_custom_call.1} parent=15 // pred_fallthru
          _
        // Predicated region
        $region21: #{tpu_custom_call.1} parent=15 // pred_check
          %p241 = pneg %p89
        $region22: #{tpu_custom_call.1} parent=15 // pred_check_branch
          %243 = sbr.rel (%p241) target = $region24
        $region23: #{tpu_custom_call.1} parent=15 // pred_region
          %s244 = sand.u32 %s27, 1
          %s245 = scalar_lea.sflag [#allocation6], %s244
          %s246 = sand.u32 %s79, 1
          %s247 = smul.addr %s246, 8
          %s248 = scalar_lea.vmem [#allocation5], %s247
          %s250 = ssub.s32 128, 128
          %251 = vsyncadd %s245, %s250
          %s252 = sadd.s32 %s35, %s34
          %s253 = smul.addr %s252, 128
          %s254 = scalar_lea.hbm %s1, %s253
          %s256 = sshll.u32 %s248, 4
          %s257 = int_to_ptr.vmem [resolvable:$true] %s256
          %259 = dma.hbm_to_vmem [thread:$0]  %s254, 128, %s257, %s245
        $region24: #{tpu_custom_call.1} parent=15 // pred_fallthru
          _
        // Predicated region
        $region25: #{tpu_custom_call.1} parent=15 // pred_check
          %p260 = pneg %p115
        $region26: #{tpu_custom_call.1} parent=15 // pred_check_branch
          %262 = sbr.rel (%p260) target = $region28
        $region27: #{tpu_custom_call.1} parent=15 // pred_region
          %s263 = sand.u32 %s27, 1
          %s264 = scalar_lea.sflag [#allocation6], %s263
          %s265 = sand.u32 %s105, 1
          %s266 = smul.addr %s265, 8
          %s267 = scalar_lea.vmem [#allocation7], %s266
          %s269 = ssub.s32 128, 128
          %270 = vsyncadd %s264, %s269
          %s271 = smul.addr %s34, 128
          %s272 = scalar_lea.hbm %s2, %s271
          %s274 = sshll.u32 %s267, 4
          %s275 = int_to_ptr.vmem [resolvable:$true] %s274
          %277 = dma.hbm_to_vmem [thread:$0]  %s272, 128, %s275, %s264
        $region28: #{tpu_custom_call.1} parent=15 // pred_fallthru
          _
        // Predicated region
        $region29: #{tpu_custom_call.1} parent=15 // pred_check
          %p278 = pneg %p141
        $region30: #{tpu_custom_call.1} parent=15 // pred_check_branch
          %280 = sbr.rel (%p278) target = $region32
        $region31: #{tpu_custom_call.1} parent=15 // pred_region
          %s281 = sand.u32 %s131, 1
          %s282 = scalar_lea.sflag [#allocation9], %s281
          %s283 = sand.u32 %s131, 1
          %s284 = smul.addr %s283, 8
          %s285 = scalar_lea.vmem [#allocation8], %s284
          %s287 = ssub.s32 128, 128
          %288 = vsyncadd %s282, %s287
          %s289 = smul.addr %s34, 128
          %s290 = scalar_lea.hbm %s3, %s289
          %s292 = sshll.u32 %s285, 4
          %s293 = int_to_ptr.vmem [resolvable:$true] %s292
          %295 = dma.hbm_to_vmem [thread:$0]  %s290, 128, %s293, %s282
        $region32: #{tpu_custom_call.1} parent=15 // pred_fallthru
          _
      $region16: #{tpu_custom_call.1} parent=5 // pred_fallthru
        _
      %p296 = scmp.le.s32.totalorder 1, %s27
      %p297 = scmp.lt.s32.totalorder %s27, 3
      %p298 = pnand %p296, %p297
      %p299 = pneg %p298
      // Predicated region
      $region33: #{tpu_custom_call.1} parent=5 // pred_check
        _
      $region34: #{tpu_custom_call.1} parent=5 // pred_check_branch
        %301 = sbr.rel (%p298) target = $region36
      $region35: #{tpu_custom_call.1} parent=5 // pred_region
        %s302 = ssub.s32 %s27, 1
        %s303 = sand.u32 %s54, 1
        %s304 = scalar_lea.sflag [#allocation3], %s303
        %s305 = sand.u32 %s54, 1
        %s306 = smul.addr %s305, 2
        %s307 = scalar_lea.vmem [#allocation2], %s306
        // Predicated region
        $region37: #{tpu_custom_call.1} parent=35 // pred_check
          %p308 = pneg %p67
        $region38: #{tpu_custom_call.1} parent=35 // pred_check_branch
          %310 = sbr.rel (%p308) target = $region40
        $region39: #{tpu_custom_call.1} parent=35 // pred_region
          %311 = dma.done %s304, 32
        $region40: #{tpu_custom_call.1} parent=35 // pred_fallthru
          _
        %s312 = sand.u32 %s32, 1
        %s313 = scalar_lea.sflag [#allocation6], %s312
        %s314 = sand.u32 %s82, 1
        %s315 = smul.addr %s314, 8
        %s316 = scalar_lea.vmem [#allocation5], %s315
        // Predicated region
        $region41: #{tpu_custom_call.1} parent=35 // pred_check
          %p317 = pneg %p95
        $region42: #{tpu_custom_call.1} parent=35 // pred_check_branch
          %319 = sbr.rel (%p317) target = $region44
        $region43: #{tpu_custom_call.1} parent=35 // pred_region
          %320 = dma.done %s313, 128
        $region44: #{tpu_custom_call.1} parent=35 // pred_fallthru
          _
        %s321 = sand.u32 %s32, 1
        %s322 = scalar_lea.sflag [#allocation6], %s321
        %s323 = sand.u32 %s108, 1
        %s324 = smul.addr %s323, 8
        %s325 = scalar_lea.vmem [#allocation7], %s324
        // Predicated region
        $region45: #{tpu_custom_call.1} parent=35 // pred_check
          %p326 = pneg %p121
        $region46: #{tpu_custom_call.1} parent=35 // pred_check_branch
          %328 = sbr.rel (%p326) target = $region48
        $region47: #{tpu_custom_call.1} parent=35 // pred_region
          %329 = dma.done %s322, 128
        $region48: #{tpu_custom_call.1} parent=35 // pred_fallthru
          _
        %s330 = sand.u32 %s134, 1
        %s331 = scalar_lea.sflag [#allocation9], %s330
        %s332 = sand.u32 %s134, 1
        %s333 = smul.addr %s332, 8
        %s334 = scalar_lea.vmem [#allocation8], %s333
        // Predicated region
        $region49: #{tpu_custom_call.1} parent=35 // pred_check
          %p335 = pneg %p147
        $region50: #{tpu_custom_call.1} parent=35 // pred_check_branch
          %337 = sbr.rel (%p335) target = $region52
        $region51: #{tpu_custom_call.1} parent=35 // pred_region
          %338 = dma.done %s331, 128
        $region52: #{tpu_custom_call.1} parent=35 // pred_fallthru
          _
        %s339 = sand.u32 %s54, 1
        %s340 = scalar_lea.sflag [#allocation3], %s339
        %s341 = sand.u32 %s54, 1
        %s342 = smul.addr %s341, 2
        %s343 = scalar_lea.vmem [#allocation2], %s342
        %p344 = pneg %p67
        %p345 = pneg %p64
        %s346 = sand.u32 %s32, 1
        %s347 = scalar_lea.sflag [#allocation6], %s346
        %s348 = sand.u32 %s82, 1
        %s349 = smul.addr %s348, 8
        %s350 = scalar_lea.vmem [#allocation5], %s349
        %p351 = pneg %p95
        %p352 = pneg %p92
        %s353 = sand.u32 %s32, 1
        %s354 = scalar_lea.sflag [#allocation6], %s353
        %s355 = sand.u32 %s108, 1
        %s356 = smul.addr %s355, 8
        %s357 = scalar_lea.vmem [#allocation7], %s356
        %p358 = pneg %p121
        %p359 = pneg %p118
        %s360 = sand.u32 %s134, 1
        %s361 = scalar_lea.sflag [#allocation9], %s360
        %s362 = sand.u32 %s134, 1
        %s363 = smul.addr %s362, 8
        %s364 = scalar_lea.vmem [#allocation8], %s363
        %p365 = pneg %p147
        %p366 = pneg %p144
        %p367 = pneg %p175
        %p368 = pneg %p172
        %s369 = sand.u32 %s162, 1
        %s370 = scalar_lea.sflag [#allocation4], %s369
        %s371 = sand.u32 %s162, 1
        %s372 = smul.addr %s371, 8
        %s373 = scalar_lea.vmem [#allocation10], %s372
        %p374 = pneg %p203
        %p375 = pneg %p200
        %s376 = sand.u32 %s190, 1
        %s377 = scalar_lea.sflag [#allocation12], %s376
        %s378 = sand.u32 %s190, 1
        %s379 = smul.addr %s378, 8
        %s380 = scalar_lea.vmem [#allocation11], %s379
        %v383 = vld [vmem:[%s316] sm:$0xff]
        %v384 = vld [vmem:[%s325] sm:$0xff]
        %v385 = vld [vmem:[%s334] sm:$0xff]
        %v386 = vmul.f32 %v383, 0.17677669
        %vm387 = vcmask 261120
        %v389 = vsel %vm387, %v386, 0
        %v392 = vsel %vm387, %v384, 0
        %394 = vmatprep.subr.mxu0 0.0
        %395 = vmatpush1.xpose.msra.mxu0 %v392
        %396 = vmatprep.subr.mxu0 0.0
        %397 = vmatpush1.xpose.msra.mxu0 0.0
        %398 = vmatprep.subr.mxu0 0.0
        %399 = vmatpush1.xpose.msra.mxu0 0.0
        %400 = vmatprep.subr.mxu0 0.0
        %401 = vmatpush1.xpose.msra.mxu0 0.0
        %402 = vmatprep.subr.mxu0 0.0
        %403 = vmatpush1.xpose.msra.mxu0 0.0
        %404 = vmatprep.subr.mxu0 0.0
        %405 = vmatpush1.xpose.msra.mxu0 0.0
        %406 = vmatprep.subr.mxu0 0.0
        %407 = vmatpush1.xpose.msra.mxu0 0.0
        %408 = vmatprep.subr.mxu0 0.0
        %409 = vmatpush1.xpose.msra.mxu0 0.0
        %410 = vmatprep.subr.mxu0 0.0
        %411 = vmatpush1.xpose.msra.mxu0 0.0
        %412 = vmatprep.subr.mxu0 0.0
        %413 = vmatpush1.xpose.msra.mxu0 0.0
        %414 = vmatprep.subr.mxu0 0.0
        %415 = vmatpush1.xpose.msra.mxu0 0.0
        %416 = vmatprep.subr.mxu0 0.0
        %417 = vmatpush1.xpose.msra.mxu0 0.0
        %418 = vmatprep.subr.mxu0 0.0
        %419 = vmatpush1.xpose.msra.mxu0 0.0
        %420 = vmatprep.subr.mxu0 0.0
        %421 = vmatpush1.xpose.msra.mxu0 0.0
        %422 = vmatprep.subr.mxu0 0.0
        %423 = vmatpush1.xpose.msra.mxu0 0.0
        %424 = vmatprep.subr.mxu0 0.0
        %425 = vmatpush1.xpose.msra.mxu0 0.0
        %426 = vmatprep.subr.mxu0 0.0
        %427 = vmatpush1.xpose.msra.mxu0 0.0
        %428 = vmatprep.subr.mxu0 0.0
        %429 = vmatpush1.xpose.msra.mxu0 0.0
        %430 = vmatprep.subr.mxu0 0.0
        %431 = vmatpush1.xpose.msra.mxu0 0.0
        %432 = vmatprep.subr.mxu0 0.0
        %433 = vmatpush1.xpose.msra.mxu0 0.0
        %434 = vmatprep.subr.mxu0 0.0
        %435 = vmatpush1.xpose.msra.mxu0 0.0
        %436 = vmatprep.subr.mxu0 0.0
        %437 = vmatpush1.xpose.msra.mxu0 0.0
        %438 = vmatprep.subr.mxu0 0.0
        %439 = vmatpush1.xpose.msra.mxu0 0.0
        %440 = vmatprep.subr.mxu0 0.0
        %441 = vmatpush1.xpose.msra.mxu0 0.0
        %442 = vmatprep.subr.mxu0 0.0
        %443 = vmatpush1.xpose.msra.mxu0 0.0
        %444 = vmatprep.subr.mxu0 0.0
        %445 = vmatpush1.xpose.msra.mxu0 0.0
        %446 = vmatprep.subr.mxu0 0.0
        %447 = vmatpush1.xpose.msra.mxu0 0.0
        %448 = vmatprep.subr.mxu0 0.0
        %449 = vmatpush1.xpose.msra.mxu0 0.0
        %450 = vmatprep.subr.mxu0 0.0
        %451 = vmatpush1.xpose.msra.mxu0 0.0
        %452 = vmatprep.subr.mxu0 0.0
        %453 = vmatpush1.xpose.msra.mxu0 0.0
        %454 = vmatprep.subr.mxu0 0.0
        %455 = vmatpush1.xpose.msra.mxu0 0.0
        %456 = vmatprep.subr.mxu0 0.0
        %457 = vmatpush1.xpose.msra.mxu0 0.0
        %458 = vmatprep.mubr.f32.mxu0 0.0
        %459 = vmatmul.mubr.f32.gmra.mrb[0].mxu0 %v389
        %v460 = vpop.f32.mrb[0].mxu0
        %v461 = vadd.f32 0.0, %v460
        %v462 = vpop.f32.mrb[0].mxu0
        %463 = vdwg.mxu0
        %v464 = vld [vmem:[%s307] sm:$0x3]
        %vm465 = vnez %v464
        %v466 = vsel %vm465, 16843009, 0
        %v467 = vunpack.c.0.s8 %v466
        %vm468 = vcmp.ne.s32.totalorder %v467, 0
        %v469 = vsel %vm468, -1000000.0, %v461
        %vm470 = vcmask 64512
        %v471 = vsel %vm470, %v469, -inf
        %472 = vmax.xlane.f32.xlu0 %v471
        %v473 = vpop.xlane.xlu0 %472
        %v474 = vsub.f32 %v469, %v473
        %v475 = vmul.f32 %v474, 1.442695
        %v476 = vpow.pop %v475
        %v477 = vsel %vm470, %v476, 0.0
        %478 = vadd.xlane.f32.xlu0 %v477
        %v479 = vpop.xlane.xlu0 %478
        %v480 = vrcp.pop %v479
        %v481 = vmul.f32 %v476, %v480
        %482 = vst.msk [vmem:[%s380] sm:$0xff] %vm470, %v481
        %v484 = vsel %vm470, %v481, 0
        %486 = vmatprep.subr.mxu0 0.0
        %487 = vmatpush1.msra.mxu0 %v385
        %488 = vmatprep.subr.mxu0 0.0
        %489 = vmatpush1.msra.mxu0 0.0
        %490 = vmatprep.subr.mxu0 0.0
        %491 = vmatpush1.msra.mxu0 0.0
        %492 = vmatprep.subr.mxu0 0.0
        %493 = vmatpush1.msra.mxu0 0.0
        %494 = vmatprep.subr.mxu0 0.0
        %495 = vmatpush1.msra.mxu0 0.0
        %496 = vmatprep.subr.mxu0 0.0
        %497 = vmatpush1.msra.mxu0 0.0
        %498 = vmatprep.subr.mxu0 0.0
        %499 = vmatpush1.msra.mxu0 0.0
        %500 = vmatprep.subr.mxu0 0.0
        %501 = vmatpush1.msra.mxu0 0.0
        %502 = vmatprep.subr.mxu0 0.0
        %503 = vmatpush1.msra.mxu0 0.0
        %504 = vmatprep.subr.mxu0 0.0
        %505 = vmatpush1.msra.mxu0 0.0
        %506 = vmatprep.subr.mxu0 0.0
        %507 = vmatpush1.msra.mxu0 0.0
        %508 = vmatprep.subr.mxu0 0.0
        %509 = vmatpush1.msra.mxu0 0.0
        %510 = vmatprep.subr.mxu0 0.0
        %511 = vmatpush1.msra.mxu0 0.0
        %512 = vmatprep.subr.mxu0 0.0
        %513 = vmatpush1.msra.mxu0 0.0
        %514 = vmatprep.subr.mxu0 0.0
        %515 = vmatpush1.msra.mxu0 0.0
        %516 = vmatprep.subr.mxu0 0.0
        %517 = vmatpush1.msra.mxu0 0.0
        %518 = vmatprep.subr.mxu0 0.0
        %519 = vmatpush1.msra.mxu0 0.0
        %520 = vmatprep.subr.mxu0 0.0
        %521 = vmatpush1.msra.mxu0 0.0
        %522 = vmatprep.subr.mxu0 0.0
        %523 = vmatpush1.msra.mxu0 0.0
        %524 = vmatprep.subr.mxu0 0.0
        %525 = vmatpush1.msra.mxu0 0.0
        %526 = vmatprep.subr.mxu0 0.0
        %527 = vmatpush1.msra.mxu0 0.0
        %528 = vmatprep.subr.mxu0 0.0
        %529 = vmatpush1.msra.mxu0 0.0
        %530 = vmatprep.subr.mxu0 0.0
        %531 = vmatpush1.msra.mxu0 0.0
        %532 = vmatprep.subr.mxu0 0.0
        %533 = vmatpush1.msra.mxu0 0.0
        %534 = vmatprep.subr.mxu0 0.0
        %535 = vmatpush1.msra.mxu0 0.0
        %536 = vmatprep.subr.mxu0 0.0
        %537 = vmatpush1.msra.mxu0 0.0
        %538 = vmatprep.subr.mxu0 0.0
        %539 = vmatpush1.msra.mxu0 0.0
        %540 = vmatprep.subr.mxu0 0.0
        %541 = vmatpush1.msra.mxu0 0.0
        %542 = vmatprep.subr.mxu0 0.0
        %543 = vmatpush1.msra.mxu0 0.0
        %544 = vmatprep.subr.mxu0 0.0
        %545 = vmatpush1.msra.mxu0 0.0
        %546 = vmatprep.subr.mxu0 0.0
        %547 = vmatpush1.msra.mxu0 0.0
        %548 = vmatprep.subr.mxu0 0.0
        %549 = vmatpush1.msra.mxu0 0.0
        %550 = vmatprep.mubr.f32.mxu0 0.0
        %551 = vmatmul.mubr.f32.gmra.mrb[0].mxu0 %v484
        %v552 = vpop.f32.mrb[0].mxu0
        %v553 = vadd.f32 0.0, %v552
        %v554 = vpop.f32.mrb[0].mxu0
        %555 = vdwg.mxu0
        %556 = vst.msk [vmem:[%s373] sm:$0xff] %vm387, %v553
        %s557 = sand.u32 %s162, 1
        %s558 = scalar_lea.sflag [#allocation4], %s557
        %s559 = sand.u32 %s162, 1
        %s560 = smul.addr %s559, 8
        %s561 = scalar_lea.vmem [#allocation10], %s560
        %s562 = sand.u32 %s190, 1
        %s563 = scalar_lea.sflag [#allocation12], %s562
        %s564 = sand.u32 %s190, 1
        %s565 = smul.addr %s564, 8
        %s566 = scalar_lea.vmem [#allocation11], %s565
        // Predicated region
        $region53: #{tpu_custom_call.1} parent=35 // pred_check
          %p567 = pneg %p172
        $region54: #{tpu_custom_call.1} parent=35 // pred_check_branch
          %569 = sbr.rel (%p567) target = $region56
        $region55: #{tpu_custom_call.1} parent=35 // pred_region
          %s571 = ssub.s32 128, 128
          %572 = vsyncadd %s558, %s571
          %s573 = sadd.s32 %s37, %s36
          %s574 = smul.addr %s573, 128
          %s575 = scalar_lea.hbm %s4, %s574
          %s577 = sshll.u32 %s561, 4
          %s578 = int_to_ptr.vmem [resolvable:$true] %s577
          %580 = dma.vmem_to_hbm [thread:$0]  %s578, 128, %s575, %s558
        $region56: #{tpu_custom_call.1} parent=35 // pred_fallthru
          _
        // Predicated region
        $region57: #{tpu_custom_call.1} parent=35 // pred_check
          %p581 = pneg %p200
        $region58: #{tpu_custom_call.1} parent=35 // pred_check_branch
          %583 = sbr.rel (%p581) target = $region60
        $region59: #{tpu_custom_call.1} parent=35 // pred_region
          %s585 = ssub.s32 128, 128
          %586 = vsyncadd %s563, %s585
          %s587 = sadd.s32 %s37, %s36
          %s588 = smul.addr %s587, 128
          %s589 = scalar_lea.hbm %s5, %s588
          %s591 = sshll.u32 %s566, 4
          %s592 = int_to_ptr.vmem [resolvable:$true] %s591
          %594 = dma.vmem_to_hbm [thread:$0]  %s592, 128, %s589, %s563
        $region60: #{tpu_custom_call.1} parent=35 // pred_fallthru
          _
      $region36: #{tpu_custom_call.1} parent=5 // pred_fallthru
        _
      %p595 = scmp.le.s32.totalorder 2, %s27
      // Predicated region
      $region61: #{tpu_custom_call.1} parent=5 // pred_check
        %p596 = pneg %p595
      $region62: #{tpu_custom_call.1} parent=5 // pred_check_branch
        %598 = sbr.rel (%p596) target = $region64
      $region63: #{tpu_custom_call.1} parent=5 // pred_region
        %s599 = ssub.s32 %s27, 2
        // Predicated region
        $region65: #{tpu_custom_call.1} parent=63 // pred_check
          %p600 = pneg %p178
        $region66: #{tpu_custom_call.1} parent=63 // pred_check_branch
          %602 = sbr.rel (%p600) target = $region68
        $region67: #{tpu_custom_call.1} parent=63 // pred_region
          %s603 = sand.u32 %s163, 1
          %s604 = scalar_lea.sflag [#allocation4], %s603
          %s605 = sand.u32 %s163, 1
          %s606 = smul.addr %s605, 8
          %s607 = scalar_lea.vmem [#allocation10], %s606
          %608 = dma.done %s604, 128
        $region68: #{tpu_custom_call.1} parent=63 // pred_fallthru
          _
        // Predicated region
        $region69: #{tpu_custom_call.1} parent=63 // pred_check
          %p609 = pneg %p206
        $region70: #{tpu_custom_call.1} parent=63 // pred_check_branch
          %611 = sbr.rel (%p609) target = $region72
        $region71: #{tpu_custom_call.1} parent=63 // pred_region
          %s612 = sand.u32 %s191, 1
          %s613 = scalar_lea.sflag [#allocation12], %s612
          %s614 = sand.u32 %s191, 1
          %s615 = smul.addr %s614, 8
          %s616 = scalar_lea.vmem [#allocation11], %s615
          %617 = dma.done %s613, 128
        $region72: #{tpu_custom_call.1} parent=63 // pred_fallthru
          _
      $region64: #{tpu_custom_call.1} parent=5 // pred_fallthru
        _
    $region6: #{tpu_custom_call.1} parent=1 // loop_footer
      %s31 = sadd.s32 1, %s27
    $region7: #{tpu_custom_call.1} parent=1 // loop_footer_branch
      %26 = sbr.rel target = $region3
    $region8: #{tpu_custom_call.1} parent=1 // loop_exit
      _
    %618 = vsyncpa [#allocation3], 1
    %s619 = scalar_lea.sflag [#allocation3], 1
    %620 = vsyncpa %s619, 1
    %621 = vsyncpa [#allocation6], 1
    %s622 = scalar_lea.sflag [#allocation6], 1
    %623 = vsyncpa %s622, 1
    %624 = vsyncpa [#allocation9], 1
    %s625 = scalar_lea.sflag [#allocation9], 1
    %626 = vsyncpa %s625, 1
    %627 = vsyncpa [#allocation4], 1
    %s628 = scalar_lea.sflag [#allocation4], 1
    %629 = vsyncpa %s628, 1
    %630 = vsyncpa [#allocation12], 1
    %s631 = scalar_lea.sflag [#allocation12], 1
    %632 = vsyncpa %s631, 1

</llo_original>
